<compile_context>
chip_gen: v6e
topology: v6e:2x2x1
jax: 0.10.0
libtpu: 0.0.40
codegen_flags: <defaults>
</compile_context>

<pallas_src>
import functools

import jax
import jax.numpy as jnp
from jax import lax
from jax.experimental import pallas as pl
from jax.experimental.pallas import tpu as pltpu

MAX_LOGSIGMA = 10.0
MIN_LOGSIGMA = -10.0
EPS = 1e-6
DELTA = 0.005
F32 = jnp.float32
BF16 = jnp.bfloat16
NCORES = 2          # megacore split of the q_eta_map contraction (harmless on 1-TC chips)


def _round_up(x, m):
    return ((x + m - 1) // m) * m


def _tpu_vmem_bytes():
    try:
        return int(pltpu.get_tpu_info().vmem_capacity_bytes)
    except Exception:
        return 64 * 1024 * 1024          # conservative (v7x-sized) fallback


_PHYS_VMEM = _tpu_vmem_bytes()
# v5e/v6e (128 MiB physical VMEM): 96 MiB scoped; v7x (64 MiB): 48 MiB scoped.
VMEM_LIMIT = int(min(96 * 1024 * 1024, (_PHYS_VMEM * 3) // 4))
TILE_V = 2048 if _PHYS_VMEM >= (100 << 20) else 1024    # vocab tile, fused kernel
TILE_K = TILE_V                                         # vocab tile, q_eta_map


def _choose_tile(v, target):
    return max(128, min(target, _round_up(v, 128)))


# ----------------------------------------------------------------------------
# Kernel 1: q_eta_map   y = x @ W + b     (contraction over the vocab axis)
#
# Fast path (M = S*T rows fit one tile): grid = (NCORES [parallel], vocab
# halves [arbitrary]); each core streams a disjoint half of W (bf16) and
# produces a partial (M, E) summed in JAX -> both v7x TensorCores are used.
# Fallback (large M): classic (row tiles, K tiles) accumulator matmul.
# ----------------------------------------------------------------------------
def _split_linear_kernel(x_ref, w_ref, o_ref, acc_ref):
    k = pl.program_id(1)

    @pl.when(k == 0)
    def _():
        acc_ref[...] = jnp.zeros_like(acc_ref)

    acc_ref[...] += jnp.dot(x_ref[...].astype(BF16), w_ref[...],
                            preferred_element_type=F32)

    @pl.when(k == pl.num_programs(1) - 1)
    def _():
        o_ref[...] = acc_ref[...]


def _tiled_linear_kernel(x_ref, w_ref, b_ref, o_ref, acc_ref):
    k = pl.program_id(1)

    @pl.when(k == 0)
    def _():
        acc_ref[...] = jnp.broadcast_to(b_ref[...], acc_ref.shape)

    acc_ref[...] += jnp.dot(x_ref[...].astype(BF16), w_ref[...],
                            preferred_element_type=F32)

    @pl.when(k == pl.num_programs(1) - 1)
    def _():
        o_ref[...] = acc_ref[...]


def tiled_linear(x, w, b, n_out, *, tile_m=512):
    """x: (M, V) f32, w: (Vk, N) bf16 (pre-padded), b: (1, N) f32 -> (M, n_out)."""
    M, V = x.shape
    N = w.shape[1]
    TK = _choose_tile(V, TILE_K)
    Vk = _round_up(V, NCORES * TK)
    if w.shape[0] != Vk:                          # fallback if caller passed unpadded W
        w = jnp.pad(w, ((0, Vk - w.shape[0]), (0, 0)))
    Mp = _round_up(max(M, 1), 8)
    if (Mp, Vk) != (M, V):
        x = jnp.pad(x, ((0, Mp - M), (0, Vk - V)))

    if Mp <= tile_m:
        nkh = Vk // (NCORES * TK)
        cost = pl.CostEstimate(
            flops=2 * Mp * Vk * N, transcendentals=0,
            bytes_accessed=4 * Mp * Vk + 2 * Vk * N + 4 * NCORES * Mp * N)
        parts = pl.pallas_call(
            _split_linear_kernel,
            grid=(NCORES, nkh),
            in_specs=[
                pl.BlockSpec((Mp, TK), lambda c, k: (0, c * nkh + k)),
                pl.BlockSpec((TK, N), lambda c, k: (c * nkh + k, 0)),
            ],
            out_specs=pl.BlockSpec((Mp, N), lambda c, k: (c, 0)),
            out_shape=jax.ShapeDtypeStruct((NCORES * Mp, N), F32),
            scratch_shapes=[pltpu.VMEM((Mp, N), F32)],
            compiler_params=pltpu.CompilerParams(
                dimension_semantics=("parallel", "arbitrary"),
                vmem_limit_bytes=VMEM_LIMIT),
            cost_estimate=cost,
        )(x, w)
        y = parts.reshape(NCORES, Mp, N).sum(axis=0) + b
        return y[:M, :n_out]

    # ---- fallback: classic row-tiled accumulator matmul ---------------------
    TM = tile_m
    Mp2 = _round_up(Mp, TM)
    if Mp2 != Mp:
        x = jnp.pad(x, ((0, Mp2 - Mp), (0, 0)))
    nm, nk = Mp2 // TM, Vk // TK
    cost = pl.CostEstimate(
        flops=2 * Mp2 * Vk * N, transcendentals=0,
        bytes_accessed=4 * Mp2 * Vk + 2 * nm * Vk * N + 4 * Mp2 * N)
    out = pl.pallas_call(
        _tiled_linear_kernel,
        grid=(nm, nk),
        in_specs=[
            pl.BlockSpec((TM, TK), lambda i, k: (i, k)),
            pl.BlockSpec((TK, N), lambda i, k: (k, 0)),
            pl.BlockSpec((1, N), lambda i, k: (0, 0)),
        ],
        out_specs=pl.BlockSpec((TM, N), lambda i, k: (i, 0)),
        out_shape=jax.ShapeDtypeStruct((Mp2, N), F32),
        scratch_shapes=[pltpu.VMEM((TM, N), F32)],
        compiler_params=pltpu.CompilerParams(
            dimension_semantics=("parallel", "arbitrary"),
            vmem_limit_bytes=VMEM_LIMIT),
        cost_estimate=cost,
    )(x, w, b)
    return out[:M, :n_out]


# ----------------------------------------------------------------------------
# Kernel 2: fused get_theta + get_beta + get_nll, two-phase grid over vocab.
#   phase 0: accumulate q_theta layer-1 (nbows @ W1_v), compute topic logits
#            alpha @ rho^T per tile, CACHE them in VMEM, keep an online
#            (running max/sum) logsumexp; at last tile run the MLP tail,
#            clamp, softmax(theta), kl_theta.
#   phase 1: beta tile = exp(cached logit - lse);  nll_d += -sum_v log(theta@beta)*bows.
#   theta never round-trips HBM; beta is never materialized; rho streams once.
# ----------------------------------------------------------------------------
def theta_beta_nll_kernel(
    nbows_ref, bows_ref, w1v_ref, rho_ref, eta_ref, w1k_ref, b1_ref,
    w2_ref, b2_ref, wh_ref, bh_ref, alpha_ref,
    kl_ref, nll_ref,
    h1_acc, m_acc, l_acc, theta_sc, nll_acc, logit_cache,
    *, vocab_size):
    p = pl.program_id(0)
    v = pl.program_id(1)
    nv = pl.num_programs(1)
    K = alpha_ref.shape[0]
    TV = rho_ref.shape[0]

    # mask for zero-padded vocab columns (weights padded up to a TV multiple)
    col = lax.broadcasted_iota(jnp.int32, (1, TV), 1) + v * TV
    valid = col < vocab_size

    # ---------------- phase 0: layer-1 accum + cached logits + logsumexp ----
    @pl.when(jnp.logical_and(p == 0, v == 0))
    def _():
        h1_acc[...] = (
            jnp.dot(eta_ref[...], w1k_ref[...], preferred_element_type=F32)
            + jnp.broadcast_to(b1_ref[...], h1_acc.shape))
        m_acc[...] = jnp.full_like(m_acc, -jnp.inf)
        l_acc[...] = jnp.zeros_like(l_acc)

    @pl.when(p == 0)
    def _():
        h1_acc[...] += jnp.dot(nbows_ref[...].astype(BF16), w1v_ref[...],
                               preferred_element_type=F32)
        # logits = alpha @ rho_tile^T without materializing a transpose
        logit = lax.dot_general(alpha_ref[...], rho_ref[...],
                                (((1,), (1,)), ((), ())),
                                preferred_element_type=F32)          # (K, TV)
        logit = jnp.where(valid, logit, -jnp.inf)
        logit_cache[v] = logit                                       # reuse in phase 1
        m_tile = jnp.max(logit, axis=-1, keepdims=True)
        m_new = jnp.maximum(m_acc[...], m_tile)
        l_acc[...] = (l_acc[...] * jnp.exp(m_acc[...] - m_new)
                      + jnp.sum(jnp.exp(logit - m_new), axis=-1, keepdims=True))
        m_acc[...] = m_new

    @pl.when(jnp.logical_and(p == 0, v == nv - 1))
    def _():
        # q_theta MLP tail + merged mu/logsigma heads
        h1 = jnp.tanh(h1_acc[...])
        h2 = jnp.tanh(jnp.dot(h1, w2_ref[...], preferred_element_type=F32)
                      + b2_ref[...])
        heads = (jnp.dot(h2, wh_ref[...], preferred_element_type=F32)
                 + bh_ref[...])                                       # (B, 2K)
        mu = heads[:, :K]
        ls = heads[:, K:]
        # PyTorch "if any > max: clamp high; elif any < min: clamp low"
        high = jnp.broadcast_to(jnp.max(ls), ls.shape) > MAX_LOGSIGMA
        low = jnp.broadcast_to(jnp.min(ls), ls.shape) < MIN_LOGSIGMA
        ls = jnp.where(high, jnp.minimum(ls, MAX_LOGSIGMA),
                       jnp.where(low, jnp.maximum(ls, MIN_LOGSIGMA), ls))
        z = mu                                                        # eval mode
        zmax = jnp.max(z, axis=-1, keepdims=True)
        e = jnp.exp(z - zmax)
        theta_sc[...] = e / jnp.sum(e, axis=-1, keepdims=True)
        # KL(N(mu, exp(ls)) || N(eta_std, I))
        diff = mu - eta_ref[...]
        term = (jnp.exp(ls) + diff * diff) / (1.0 + EPS) - 1.0 - ls
        kl_row = 0.5 * jnp.sum(term, axis=-1, keepdims=True)          # (B, 1)
        kl_ref[...] = jnp.broadcast_to(kl_row, kl_ref.shape)          # lane-dense
        # running (max, sum) -> per-topic logsumexp for the beta softmax
        m_acc[...] = m_acc[...] + jnp.log(l_acc[...])

    # ---------------- phase 1: per-document NLL over vocab tiles -------------
    @pl.when(jnp.logical_and(p == 1, v == 0))
    def _():
        nll_acc[...] = jnp.zeros_like(nll_acc)

    @pl.when(p == 1)
    def _():
        beta = jnp.exp(logit_cache[v] - m_acc[...])                   # normalized beta tile
        res = jnp.dot(theta_sc[...], beta, preferred_element_type=F32)  # (B, TV)
        contrib = jnp.where(valid, -jnp.log(res) * bows_ref[...], 0.0)
        nll_acc[...] += jnp.sum(contrib, axis=-1, keepdims=True)

    @pl.when(jnp.logical_and(p == 1, v == nv - 1))
    def _():
        nll_ref[...] = jnp.broadcast_to(nll_acc[...], nll_ref.shape)  # lane-dense


def theta_beta_nll(normalized_bows, bows, eta_std, w1_v, w1_k, b1, w2, b2,
                   w_heads, b_heads, alpha_bf16, rho):
    B, V = bows.shape
    K = alpha_bf16.shape[0]
    R = rho.shape[1]
    H = w2.shape[0]
    TV = _choose_tile(V, TILE_V)
    Vp = _round_up(V, TV)
    nv = Vp // TV
    last = nv - 1
    # weights are pre-padded at init; this is only a safety fallback
    if rho.shape[0] != Vp:
        rho = jnp.pad(rho, ((0, Vp - rho.shape[0]), (0, 0)))
    if w1_v.shape[0] != Vp:
        w1_v = jnp.pad(w1_v, ((0, Vp - w1_v.shape[0]), (0, 0)))
    padv = Vp - V
    if padv:    # cheap: (B, V) only
        normalized_bows = jnp.pad(normalized_bows, ((0, 0), (0, padv)))
        bows = jnp.pad(bows, ((0, 0), (0, padv)))

    kernel = functools.partial(theta_beta_nll_kernel, vocab_size=V)
    cost = pl.CostEstimate(
        flops=(2 * B * Vp * H + 2 * K * R * Vp + 2 * B * K * Vp
               + 2 * B * H * H + 4 * B * H * K),
        transcendentals=K * Vp + B * Vp + 4 * B * H,
        bytes_accessed=(2 * Vp * H + 2 * Vp * R      # bf16 weights, streamed once
                        + 4 * 2 * B * Vp + 4 * (H * H + B * K)),
    )
    kl, nll = pl.pallas_call(
        kernel,
        grid=(2, nv),
        in_specs=[
            # phase-pinned index maps: during the phase that does not use a
            # tensor its block index stays on the last-fetched block -> no DMA
            # and no pipeline bubble at the phase boundary.
            pl.BlockSpec((B, TV), lambda p, v: (0, (1 - p) * v + p * last)),   # nbows
            pl.BlockSpec((B, TV), lambda p, v: (0, p * v)),                    # bows
            pl.BlockSpec((TV, H), lambda p, v: ((1 - p) * v + p * last, 0)),   # W1[:V]
            pl.BlockSpec((TV, R), lambda p, v: ((1 - p) * v + p * last, 0)),   # rho
            pl.BlockSpec((B, K), lambda p, v: (0, 0)),                         # eta_std
            pl.BlockSpec((K, H), lambda p, v: (0, 0)),                         # W1[V:]
            pl.BlockSpec((1, H), lambda p, v: (0, 0)),                         # b1
            pl.BlockSpec((H, H), lambda p, v: (0, 0)),                         # W2
            pl.BlockSpec((1, H), lambda p, v: (0, 0)),                         # b2
            pl.BlockSpec((H, 2 * K), lambda p, v: (0, 0)),                     # heads W
            pl.BlockSpec((1, 2 * K), lambda p, v: (0, 0)),                     # heads b
            pl.BlockSpec((K, R), lambda p, v: (0, 0)),                         # alpha
        ],
        out_specs=(
            pl.BlockSpec((B, 128), lambda p, v: (0, 0)),
            pl.BlockSpec((B, 128), lambda p, v: (0, 0)),
        ),
        out_shape=(
            jax.ShapeDtypeStruct((B, 128), F32),    # kl_theta (broadcast over lanes)
            jax.ShapeDtypeStruct((B, 128), F32),    # nll      (broadcast over lanes)
        ),
        scratch_shapes=[
            pltpu.VMEM((B, H), F32),        # layer-1 accumulator
            pltpu.VMEM((K, 1), F32),        # running max -> logsumexp
            pltpu.VMEM((K, 1), F32),        # running sum
            pltpu.VMEM((B, K), F32),        # theta (never leaves VMEM)
            pltpu.VMEM((B, 1), F32),        # nll accumulator
            pltpu.VMEM((nv, K, TV), F32),   # topic-logit cache (phase 0 -> phase 1)
        ],
        compiler_params=pltpu.CompilerParams(
            dimension_semantics=("arbitrary", "arbitrary"),
            vmem_limit_bytes=VMEM_LIMIT,
        ),
        cost_estimate=cost,
    )(normalized_bows, bows, w1_v, rho, eta_std, w1_k, b1, w2, b2,
      w_heads, b_heads, alpha_bf16)
    return kl[:, 0], nll[:, 0]


# ----------------------------------------------------------------------------
# Plain-JAX glue: LSTM and the eta time recurrence (tiny, strictly sequential).
# TODO(synk): LSTM/eta recurrence kept in lax.scan; single layer (eta_nlayers=1).
# ----------------------------------------------------------------------------
def lstm_forward(x, w_ih, w_hh, b_ih, b_hh):
    S, T, E = x.shape
    h0 = jnp.zeros((S, E), F32)
    c0 = jnp.zeros((S, E), F32)

    def step(carry, x_t):
        h, c = carry
        gates = x_t @ w_ih.T + b_ih + h @ w_hh.T + b_hh            # (S, 4E)
        i, f, g, o = jnp.split(gates, 4, axis=-1)
        i = jax.nn.sigmoid(i)
        f = jax.nn.sigmoid(f)
        g = jnp.tanh(g)
        o = jax.nn.sigmoid(o)
        c = f * c + i * g
        h = o * jnp.tanh(c)
        return (h, c), h

    (_, _), hs = lax.scan(step, (h0, c0), jnp.swapaxes(x, 0, 1))   # (T, S, E)
    return jnp.swapaxes(hs, 0, 1)                                  # (S, T, E)


def eta_recurrence(output, w_mu, b_mu, w_ls, b_ls, num_topics):
    S, T, E = output.shape
    K = num_topics
    log_delta = jnp.log(jnp.asarray(DELTA, F32))

    def mu_ls(inp):
        return inp @ w_mu + b_mu, inp @ w_ls + b_ls

    inp0 = jnp.concatenate([output[:, 0, :], jnp.zeros((S, K), F32)], axis=1)
    mu0, ls0 = mu_ls(inp0)
    eta0 = mu0  # eval mode
    kl0 = 0.5 * jnp.sum((jnp.exp(ls0) + mu0 ** 2) / (1.0 + EPS) - 1.0 - ls0, axis=-1)

    def step(carry, out_t):
        eta_prev, kl_acc = carry
        inp_t = jnp.concatenate([out_t, eta_prev], axis=1)
        mu_t, ls_t = mu_ls(inp_t)
        any_high = jnp.any(ls_t > MAX_LOGSIGMA)
        any_low = jnp.any(ls_t < MIN_LOGSIGMA)
        ls_t = jnp.where(any_high, jnp.minimum(ls_t, MAX_LOGSIGMA),
                         jnp.where(any_low, jnp.maximum(ls_t, MIN_LOGSIGMA), ls_t))
        eta_t = mu_t  # eval mode
        diff = mu_t - eta_prev
        kl_t = 0.5 * jnp.sum(
            (jnp.exp(ls_t) + diff ** 2) / (jnp.exp(log_delta) + EPS)
            - 1.0 + log_delta - ls_t, axis=-1)
        return (eta_t, kl_acc + jnp.sum(kl_t)), eta_t

    outs_rest = jnp.swapaxes(output[:, 1:, :], 0, 1)               # (T-1, S, E)
    (_, kl_eta), etas_rest = lax.scan(step, (eta0, jnp.sum(kl0)), outs_rest)
    etas = jnp.concatenate([eta0[:, None, :], jnp.swapaxes(etas_rest, 0, 1)], axis=1)
    return etas, kl_eta


# ----------------------------------------------------------------------------
# Parameter init (deterministic, synthetic — mirrors the module's __init__).
# V-sized weights are padded to tile multiples HERE (not per forward) and the
# big streamed ones are stored in bf16.
# ----------------------------------------------------------------------------
def init_params(key, K, V, H, E, R):
    ks = jax.random.split(key, 16)

    def lin(k, fin, fout):
        bound = 1.0 / (fin ** 0.5)
        kw, kb = jax.random.split(k)
        w = jax.random.uniform(kw, (fin, fout), F32, -bound, bound)
        b = jax.random.uniform(kb, (1, fout), F32, -bound, bound)
        return w, b

    TV = _choose_tile(V, TILE_V)
    Vp = _round_up(V, TV)
    TK = _choose_tile(V, TILE_K)
    Vk = _round_up(V, NCORES * TK)
    Ep = _round_up(E, 128)

    p = {}
    p["mu_q_alpha"] = jax.random.normal(ks[0], (K, R), F32)
    p["logsigma_q_alpha"] = jax.random.normal(ks[1], (K, R), F32)
    rho = 0.1 * jax.random.normal(ks[2], (V, R), F32)               # fixed word embeddings
    p["rho"] = jnp.pad(rho, ((0, Vp - V), (0, 0))).astype(BF16)
    w1, b1 = lin(ks[3], V + K, H)
    p["q_theta_w1_v"] = jnp.pad(w1[:V], ((0, Vp - V), (0, 0))).astype(BF16)
    p["q_theta_w1_k"] = w1[V:]
    p["q_theta_b1"] = b1
    p["q_theta_w2"], p["q_theta_b2"] = lin(ks[4], H, H)
    wmu, bmu = lin(ks[5], H, K)
    wls, bls = lin(ks[6], H, K)
    p["theta_heads_w"] = jnp.concatenate([wmu, wls], axis=1)        # (H, 2K) merged heads
    p["theta_heads_b"] = jnp.concatenate([bmu, bls], axis=1)        # (1, 2K)
    w_eta, b_eta = lin(ks[7], V, E)
    p["q_eta_map_w"] = jnp.pad(w_eta, ((0, Vk - V), (0, Ep - E))).astype(BF16)
    p["q_eta_map_b"] = jnp.pad(b_eta, ((0, 0), (0, Ep - E)))        # (1, Ep), lane-dense out
    bnd = 1.0 / (E ** 0.5)
    p["lstm_w_ih"] = jax.random.uniform(ks[8], (4 * E, E), F32, -bnd, bnd)
    p["lstm_w_hh"] = jax.random.uniform(ks[9], (4 * E, E), F32, -bnd, bnd)
    p["lstm_b_ih"] = jax.random.uniform(ks[10], (4 * E,), F32, -bnd, bnd)
    p["lstm_b_hh"] = jax.random.uniform(ks[11], (4 * E,), F32, -bnd, bnd)
    wm, bm = lin(ks[12], E + K, K)
    p["mu_q_eta_w"], p["mu_q_eta_b"] = wm, bm.reshape(K)
    wl, bl = lin(ks[13], E + K, K)
    p["logsigma_q_eta_w"], p["logsigma_q_eta_b"] = wl, bl.reshape(K)
    return p


# ----------------------------------------------------------------------------
# Forward pass
# ----------------------------------------------------------------------------
def mixmedia_forward(params, bows, normalized_bows, times, sources, rnn_inp, num_docs):
    bsz, V = bows.shape
    S, T, _ = rnn_inp.shape
    K, R = params["mu_q_alpha"].shape
    E = params["lstm_w_hh"].shape[1]
    coeff = jnp.asarray(num_docs, F32) / bsz

    # ---- get_alpha ----  (tiny: plain JAX, XLA fuses it)
    alpha = params["mu_q_alpha"]                                   # eval: mu
    mu_a = params["mu_q_alpha"]
    ls_a = params["logsigma_q_alpha"]
    kl_alpha = 0.5 * jnp.sum((jnp.exp(ls_a) + mu_a * mu_a) / (1.0 + EPS)
                             - 1.0 - ls_a)

    # ---- get_eta ----
    x_flat = rnn_inp.reshape(S * T, V)
    eta_inp = tiled_linear(x_flat, params["q_eta_map_w"], params["q_eta_map_b"], E)
    eta_inp = eta_inp.reshape(S, T, E)
    lstm_out = lstm_forward(eta_inp, params["lstm_w_ih"], params["lstm_w_hh"],
                            params["lstm_b_ih"], params["lstm_b_hh"])
    etas, kl_eta = eta_recurrence(lstm_out,
                                  params["mu_q_eta_w"], params["mu_q_eta_b"],
                                  params["logsigma_q_eta_w"], params["logsigma_q_eta_b"],
                                  K)

    # ---- get_theta + get_beta + get_nll (single fused Pallas call) ----
    eta_std = etas[sources, times]                                 # (bsz, K)
    kl_theta_per, nll_per = theta_beta_nll(
        normalized_bows, bows, eta_std,
        params["q_theta_w1_v"], params["q_theta_w1_k"], params["q_theta_b1"],
        params["q_theta_w2"], params["q_theta_b2"],
        params["theta_heads_w"], params["theta_heads_b"],
        alpha.astype(BF16), params["rho"])
    kl_theta = jnp.sum(kl_theta_per) * coeff
    nll = jnp.sum(nll_per) * coeff

    pred_loss = jnp.asarray(0.0, F32)                              # predict_labels=False
    nelbo = nll + kl_alpha + kl_eta + kl_theta
    return nelbo, nll, kl_alpha, kl_eta, kl_theta, pred_loss


# ----------------------------------------------------------------------------
if __name__ == "__main__":
    # Small config consistent with the module's args
    K = 8        # num_topics
    V = 256      # vocab_size
    H = 64       # t_hidden_size
    E = 64       # eta_hidden_size
    R = 64       # rho_size
    S = 2        # num_sources
    T = 4        # num_times
    BSZ = 8
    NUM_DOCS = 100

    key = jax.random.PRNGKey(0)
    kp, k1, k2, k3, k4 = jax.random.split(key, 5)

    params = init_params(kp, K, V, H, E, R)

    bows = jax.random.randint(k1, (BSZ, V), 0, 6).astype(F32)
    normalized_bows = bows / jnp.maximum(jnp.sum(bows, axis=1, keepdims=True), 1.0)
    times = jax.random.randint(k2, (BSZ,), 0, T)
    sources = jax.random.randint(k3, (BSZ,), 0, S)
    rnn_inp = jax.random.uniform(k4, (S, T, V), F32)

    fwd = jax.jit(mixmedia_forward)
    outs = fwd(params, bows, normalized_bows, times, sources, rnn_inp, NUM_DOCS)
    outs = jax.block_until_ready(outs)
    nelbo, nll, kl_alpha, kl_eta, kl_theta, pred_loss = outs
    assert all(bool(jnp.isfinite(x)) for x in
               [nelbo, nll, kl_alpha, kl_eta, kl_theta, pred_loss])
    print("KERNEL_OK")
</pallas_src>

<mosaic_0001>
module attributes {stable_mosaic.version = 11 : i64} {
  func.func @_split_linear_kernel(%arg0: i32, %arg1: i32, %arg2: memref<8x256xf32, #tpu.memory_space<vmem>>, %arg3: memref<256x128xbf16, #tpu.memory_space<vmem>>, %arg4: memref<8x128xf32, #tpu.memory_space<vmem>>, %arg5: memref<8x128xf32, #tpu.memory_space<vmem>>) attributes {dimension_semantics = [#tpu.dimension_semantics<parallel>, #tpu.dimension_semantics<arbitrary>], iteration_bounds = array<i64: 2, 1>, scalar_prefetch = 0 : i64, scratch_operands = 1 : i64, tpu.core_type = #tpu.core_type<tc>, window_params = [{transform_indices = @transform_0, window_bounds = array<i64: 8, 256>}, {transform_indices = @transform_1, window_bounds = array<i64: 256, 128>}, {transform_indices = @transform_2, window_bounds = array<i64: 8, 128>}]} {
    %c0_i32 = arith.constant 0 : i32
    %0 = arith.cmpi eq, %arg1, %c0_i32 : i32
    %1 = arith.extui %0 : i1 to i32
    %c0_i32_0 = arith.constant 0 : i32
    %2 = arith.cmpi ne, %1, %c0_i32_0 : i32
    scf.if %2 {
      %cst_10 = arith.constant 0.000000e+00 : f32
      %13 = vector.broadcast %cst_10 : f32 to vector<8x128xf32>
      %c0_11 = arith.constant 0 : index
      %c0_12 = arith.constant 0 : index
      %14 = vector.load %arg5[%c0_11, %c0_12] : memref<8x128xf32, #tpu.memory_space<vmem>>, vector<8x128xf32>
      tpu.vector_store %arg5[%c0_11, %c0_12], %13 {strides = array<i32>} : memref<8x128xf32, #tpu.memory_space<vmem>>, vector<8x128xf32>,
    } else {
    }
    %c0 = arith.constant 0 : index
    %c0_1 = arith.constant 0 : index
    %3 = vector.load %arg5[%c0, %c0_1] : memref<8x128xf32, #tpu.memory_space<vmem>>, vector<8x128xf32>
    %c0_2 = arith.constant 0 : index
    %c0_3 = arith.constant 0 : index
    %4 = vector.load %arg2[%c0_2, %c0_3] : memref<8x256xf32, #tpu.memory_space<vmem>>, vector<8x256xf32>
    %5 = arith.truncf %4 : vector<8x256xf32> to vector<8x256xbf16>
    %c0_4 = arith.constant 0 : index
    %c0_5 = arith.constant 0 : index
    %6 = vector.load %arg3[%c0_4, %c0_5] : memref<256x128xbf16, #tpu.memory_space<vmem>>, vector<256x128xbf16>
    %cst = arith.constant dense<0.000000e+00> : vector<8x128xf32>
    %7 = tpu.matmul %5, %6, %cst {dimension_numbers = #tpu.dot_dimension_numbers<[1], [0], [0], [1], [0, 0, 1, 1], [], []>} : vector<8x256xbf16>, vector<256x128xbf16>, vector<8x128xf32> -> vector<8x128xf32>
    %8 = arith.addf %3, %7 : vector<8x128xf32>
    %c0_6 = arith.constant 0 : index
    %c0_7 = arith.constant 0 : index
    %9 = vector.load %arg5[%c0_6, %c0_7] : memref<8x128xf32, #tpu.memory_space<vmem>>, vector<8x128xf32>
    tpu.vector_store %arg5[%c0_6, %c0_7], %8 {strides = array<i32>} : memref<8x128xf32, #tpu.memory_space<vmem>>, vector<8x128xf32>,
    %c0_i32_8 = arith.constant 0 : i32
    %10 = arith.cmpi eq, %arg1, %c0_i32_8 : i32
    %11 = arith.extui %10 : i1 to i32
    %c0_i32_9 = arith.constant 0 : i32
    %12 = arith.cmpi ne, %11, %c0_i32_9 : i32
    scf.if %12 {
      %c0_10 = arith.constant 0 : index
      %c0_11 = arith.constant 0 : index
      %13 = vector.load %arg5[%c0_10, %c0_11] : memref<8x128xf32, #tpu.memory_space<vmem>>, vector<8x128xf32>
      %c0_12 = arith.constant 0 : index
      %c0_13 = arith.constant 0 : index
      %14 = vector.load %arg4[%c0_12, %c0_13] : memref<8x128xf32, #tpu.memory_space<vmem>>, vector<8x128xf32>
      tpu.vector_store %arg4[%c0_12, %c0_13], %13 {strides = array<i32>} : memref<8x128xf32, #tpu.memory_space<vmem>>, vector<8x128xf32>,
    } else {
    }
    return
  }
  func.func @transform_0(%arg0: i32, %arg1: i32) -> (i32, i32) {
    %c1_i32 = arith.constant 1 : i32
    %0 = arith.muli %arg0, %c1_i32 : i32
    %1 = arith.addi %0, %arg1 : i32
    %c0_i32 = arith.constant 0 : i32
    %c0_i32_0 = arith.constant 0 : i32
    return %c0_i32, %1 : i32, i32
  }
  func.func @transform_1(%arg0: i32, %arg1: i32) -> (i32, i32) {
    %c1_i32 = arith.constant 1 : i32
    %0 = arith.muli %arg0, %c1_i32 : i32
    %1 = arith.addi %0, %arg1 : i32
    %c0_i32 = arith.constant 0 : i32
    %c0_i32_0 = arith.constant 0 : i32
    return %1, %c0_i32 : i32, i32
  }
  func.func @transform_2(%arg0: i32, %arg1: i32) -> (i32, i32) {
    %c0_i32 = arith.constant 0 : i32
    %c0_i32_0 = arith.constant 0 : i32
    return %arg0, %c0_i32 : i32, i32
  }
}

module attributes {stable_mosaic.version = 11 : i64} {
  func.func @theta_beta_nll_kernel(%arg0: i32, %arg1: i32, %arg2: memref<8x256xf32, #tpu.memory_space<vmem>>, %arg3: memref<8x256xf32, #tpu.memory_space<vmem>>, %arg4: memref<256x64xbf16, #tpu.memory_space<vmem>>, %arg5: memref<256x64xbf16, #tpu.memory_space<vmem>>, %arg6: memref<8x8xf32, #tpu.memory_space<vmem>>, %arg7: memref<8x64xf32, #tpu.memory_space<vmem>>, %arg8: memref<1x64xf32, #tpu.memory_space<vmem>>, %arg9: memref<64x64xf32, #tpu.memory_space<vmem>>, %arg10: memref<1x64xf32, #tpu.memory_space<vmem>>, %arg11: memref<64x16xf32, #tpu.memory_space<vmem>>, %arg12: memref<1x16xf32, #tpu.memory_space<vmem>>, %arg13: memref<8x64xbf16, #tpu.memory_space<vmem>>, %arg14: memref<8x128xf32, #tpu.memory_space<vmem>>, %arg15: memref<8x128xf32, #tpu.memory_space<vmem>>, %arg16: memref<8x64xf32, #tpu.memory_space<vmem>>, %arg17: memref<8x1xf32, #tpu.memory_space<vmem>>, %arg18: memref<8x1xf32, #tpu.memory_space<vmem>>, %arg19: memref<8x8xf32, #tpu.memory_space<vmem>>, %arg20: memref<8x1xf32, #tpu.memory_space<vmem>>, %arg21: memref<1x8x256xf32, #tpu.memory_space<vmem>>) attributes {dimension_semantics = [#tpu.dimension_semantics<arbitrary>, #tpu.dimension_semantics<arbitrary>], iteration_bounds = array<i64: 2, 1>, scalar_prefetch = 0 : i64, scratch_operands = 6 : i64, tpu.core_type = #tpu.core_type<tc>, window_params = [{transform_indices = @transform_0, window_bounds = array<i64: 8, 256>}, {transform_indices = @transform_1, window_bounds = array<i64: 8, 256>}, {transform_indices = @transform_2, window_bounds = array<i64: 256, 64>}, {transform_indices = @transform_3, window_bounds = array<i64: 256, 64>}, {pipeline_mode = #tpu.pipeline_mode<synchronous>, transform_indices = @transform_4, window_bounds = array<i64: 8, 8>}, {pipeline_mode = #tpu.pipeline_mode<synchronous>, transform_indices = @transform_5, window_bounds = array<i64: 8, 64>}, {pipeline_mode = #tpu.pipeline_mode<synchronous>, transform_indices = @transform_6, window_bounds = array<i64: 1, 64>}, {pipeline_mode = #tpu.pipeline_mode<synchronous>, transform_indices = @transform_7, window_bounds = array<i64: 64, 64>}, {pipeline_mode = #tpu.pipeline_mode<synchronous>, transform_indices = @transform_8, window_bounds = array<i64: 1, 64>}, {pipeline_mode = #tpu.pipeline_mode<synchronous>, transform_indices = @transform_9, window_bounds = array<i64: 64, 16>}, {pipeline_mode = #tpu.pipeline_mode<synchronous>, transform_indices = @transform_10, window_bounds = array<i64: 1, 16>}, {pipeline_mode = #tpu.pipeline_mode<synchronous>, transform_indices = @transform_11, window_bounds = array<i64: 8, 64>}, {pipeline_mode = #tpu.pipeline_mode<synchronous>, transform_indices = @transform_12, window_bounds = array<i64: 8, 128>}, {pipeline_mode = #tpu.pipeline_mode<synchronous>, transform_indices = @transform_13, window_bounds = array<i64: 8, 128>}]} {
    %0 = tpu.iota {dimensions = array<i32: 1>} : vector<1x256xi32>
    %c256_i32 = arith.constant 256 : i32
    %1 = arith.muli %arg1, %c256_i32 : i32
    %2 = vector.broadcast %1 : i32 to vector<1x256xi32>
    %3 = arith.addi %0, %2 : vector<1x256xi32>
    %c256_i32_0 = arith.constant 256 : i32
    %4 = vector.broadcast %c256_i32_0 : i32 to vector<1x256xi32>
    %5 = arith.cmpi slt, %3, %4 : vector<1x256xi32>
    %c0_i32 = arith.constant 0 : i32
    %6 = arith.cmpi eq, %arg0, %c0_i32 : i32
    %c0_i32_1 = arith.constant 0 : i32
    %7 = arith.cmpi eq, %arg1, %c0_i32_1 : i32
    %8 = arith.andi %6, %7 : i1
    %9 = arith.extui %8 : i1 to i32
    %c0_i32_2 = arith.constant 0 : i32
    %10 = arith.cmpi ne, %9, %c0_i32_2 : i32
    scf.if %10 {
      %c0 = arith.constant 0 : index
      %c0_15 = arith.constant 0 : index
      %32 = vector.load %arg6[%c0, %c0_15] : memref<8x8xf32, #tpu.memory_space<vmem>>, vector<8x8xf32>
      %c0_16 = arith.constant 0 : index
      %c0_17 = arith.constant 0 : index
      %33 = vector.load %arg7[%c0_16, %c0_17] : memref<8x64xf32, #tpu.memory_space<vmem>>, vector<8x64xf32>
      %cst = arith.constant dense<0.000000e+00> : vector<8x64xf32>
      %34 = tpu.matmul %32, %33, %cst {dimension_numbers = #tpu.dot_dimension_numbers<[1], [0], [0], [1], [0, 0, 1, 1], [], []>} : vector<8x8xf32>, vector<8x64xf32>, vector<8x64xf32> -> vector<8x64xf32>
      %c0_18 = arith.constant 0 : index
      %c0_19 = arith.constant 0 : index
      %35 = vector.load %arg8[%c0_18, %c0_19] : memref<1x64xf32, #tpu.memory_space<vmem>>, vector<1x64xf32>
      %36 = vector.shape_cast %35 : vector<1x64xf32> to vector<1x64xf32>
      %37 = vector.broadcast %36 : vector<1x64xf32> to vector<8x64xf32>
      %38 = arith.addf %34, %37 : vector<8x64xf32>
      %c0_20 = arith.constant 0 : index
      %c0_21 = arith.constant 0 : index
      %39 = vector.load %arg16[%c0_20, %c0_21] : memref<8x64xf32, #tpu.memory_space<vmem>>, vector<8x64xf32>
      tpu.vector_store %arg16[%c0_20, %c0_21], %38 {strides = array<i32>} : memref<8x64xf32, #tpu.memory_space<vmem>>, vector<8x64xf32>,
      %cst_22 = arith.constant 0xFF800000 : f32
      %40 = vector.broadcast %cst_22 : f32 to vector<8x1xf32>
      %c0_23 = arith.constant 0 : index
      %c0_24 = arith.constant 0 : index
      %41 = vector.load %arg17[%c0_23, %c0_24] : memref<8x1xf32, #tpu.memory_space<vmem>>, vector<8x1xf32>
      tpu.vector_store %arg17[%c0_23, %c0_24], %40 {strides = array<i32>} : memref<8x1xf32, #tpu.memory_space<vmem>>, vector<8x1xf32>,
      %cst_25 = arith.constant 0.000000e+00 : f32
      %42 = vector.broadcast %cst_25 : f32 to vector<8x1xf32>
      %c0_26 = arith.constant 0 : index
      %c0_27 = arith.constant 0 : index
      %43 = vector.load %arg18[%c0_26, %c0_27] : memref<8x1xf32, #tpu.memory_space<vmem>>, vector<8x1xf32>
      tpu.vector_store %arg18[%c0_26, %c0_27], %42 {strides = array<i32>} : memref<8x1xf32, #tpu.memory_space<vmem>>, vector<8x1xf32>,
    } else {
    }
    %c0_i32_3 = arith.constant 0 : i32
    %11 = arith.cmpi eq, %arg0, %c0_i32_3 : i32
    %12 = arith.extui %11 : i1 to i32
    %c0_i32_4 = arith.constant 0 : i32
    %13 = arith.cmpi ne, %12, %c0_i32_4 : i32
    scf.if %13 {
      %c0 = arith.constant 0 : index
      %c0_15 = arith.constant 0 : index
      %32 = vector.load %arg16[%c0, %c0_15] : memref<8x64xf32, #tpu.memory_space<vmem>>, vector<8x64xf32>
      %c0_16 = arith.constant 0 : index
      %c0_17 = arith.constant 0 : index
      %33 = vector.load %arg2[%c0_16, %c0_17] : memref<8x256xf32, #tpu.memory_space<vmem>>, vector<8x256xf32>
      %34 = arith.truncf %33 : vector<8x256xf32> to vector<8x256xbf16>
      %c0_18 = arith.constant 0 : index
      %c0_19 = arith.constant 0 : index
      %35 = vector.load %arg4[%c0_18, %c0_19] : memref<256x64xbf16, #tpu.memory_space<vmem>>, vector<256x64xbf16>
      %cst = arith.constant dense<0.000000e+00> : vector<8x64xf32>
      %36 = tpu.matmul %34, %35, %cst {dimension_numbers = #tpu.dot_dimension_numbers<[1], [0], [0], [1], [0, 0, 1, 1], [], []>} : vector<8x256xbf16>, vector<256x64xbf16>, vector<8x64xf32> -> vector<8x64xf32>
      %37 = arith.addf %32, %36 : vector<8x64xf32>
      %c0_20 = arith.constant 0 : index
      %c0_21 = arith.constant 0 : index
      %38 = vector.load %arg16[%c0_20, %c0_21] : memref<8x64xf32, #tpu.memory_space<vmem>>, vector<8x64xf32>
      tpu.vector_store %arg16[%c0_20, %c0_21], %37 {strides = array<i32>} : memref<8x64xf32, #tpu.memory_space<vmem>>, vector<8x64xf32>,
      %c0_22 = arith.constant 0 : index
      %c0_23 = arith.constant 0 : index
      %39 = vector.load %arg13[%c0_22, %c0_23] : memref<8x64xbf16, #tpu.memory_space<vmem>>, vector<8x64xbf16>
      %c0_24 = arith.constant 0 : index
      %c0_25 = arith.constant 0 : index
      %40 = vector.load %arg5[%c0_24, %c0_25] : memref<256x64xbf16, #tpu.memory_space<vmem>>, vector<256x64xbf16>
      %cst_26 = arith.constant dense<0.000000e+00> : vector<8x256xf32>
      %41 = tpu.matmul %39, %40, %cst_26 {dimension_numbers = #tpu.dot_dimension_numbers<[1], [1], [0], [0], [0, 0, 1, 0], [], []>} : vector<8x64xbf16>, vector<256x64xbf16>, vector<8x256xf32> -> vector<8x256xf32>
      %cst_27 = arith.constant 0xFF800000 : f32
      %42 = vector.shape_cast %5 : vector<1x256xi1> to vector<1x256xi1>
      %43 = vector.broadcast %42 : vector<1x256xi1> to vector<8x256xi1>
      %44 = vector.broadcast %cst_27 : f32 to vector<8x256xf32>
      %45 = arith.select %43, %41, %44 : vector<8x256xi1>, vector<8x256xf32>
      %46 = arith.index_cast %arg1 : i32 to index
      %c0_28 = arith.constant 0 : index
      %c0_29 = arith.constant 0 : index
      %47 = vector.load %arg21[%46, %c0_28, %c0_29] : memref<1x8x256xf32, #tpu.memory_space<vmem>>, vector<1x8x256xf32>
      %48 = vector.shape_cast %47 : vector<1x8x256xf32> to vector<8x256xf32>
      %49 = vector.shape_cast %45 : vector<8x256xf32> to vector<1x8x256xf32>
      tpu.vector_store %arg21[%46, %c0_28, %c0_29], %49 {strides = array<i32>} : memref<1x8x256xf32, #tpu.memory_space<vmem>>, vector<1x8x256xf32>,
      %cst_30 = arith.constant dense<0xFF800000> : vector<8xf32>
      %50 = vector.multi_reduction <maximumf>, %45, %cst_30 [1] : vector<8x256xf32> to vector<8xf32>
      %51 = vector.shape_cast %50 : vector<8xf32> to vector<8x1xf32>
      %c0_31 = arith.constant 0 : index
      %c0_32 = arith.constant 0 : index
      %52 = vector.load %arg17[%c0_31, %c0_32] : memref<8x1xf32, #tpu.memory_space<vmem>>, vector<8x1xf32>
      %53 = arith.maximumf %52, %51 : vector<8x1xf32>
      %c0_33 = arith.constant 0 : index
      %c0_34 = arith.constant 0 : index
      %54 = vector.load %arg18[%c0_33, %c0_34] : memref<8x1xf32, #tpu.memory_space<vmem>>, vector<8x1xf32>
      %c0_35 = arith.constant 0 : index
      %c0_36 = arith.constant 0 : index
      %55 = vector.load %arg17[%c0_35, %c0_36] : memref<8x1xf32, #tpu.memory_space<vmem>>, vector<8x1xf32>
      %56 = arith.subf %55, %53 : vector<8x1xf32>
      %57 = math.exp %56 : vector<8x1xf32>
      %58 = arith.mulf %54, %57 : vector<8x1xf32>
      %59 = vector.broadcast %53 : vector<8x1xf32> to vector<8x256xf32>
      %60 = arith.subf %45, %59 : vector<8x256xf32>
      %61 = math.exp %60 : vector<8x256xf32>
      %cst_37 = arith.constant dense<0.000000e+00> : vector<8xf32>
      %62 = vector.multi_reduction <add>, %61, %cst_37 [1] : vector<8x256xf32> to vector<8xf32>
      %63 = vector.shape_cast %62 : vector<8xf32> to vector<8x1xf32>
      %64 = arith.addf %58, %63 : vector<8x1xf32>
      %c0_38 = arith.constant 0 : index
      %c0_39 = arith.constant 0 : index
      %65 = vector.load %arg18[%c0_38, %c0_39] : memref<8x1xf32, #tpu.memory_space<vmem>>, vector<8x1xf32>
      tpu.vector_store %arg18[%c0_38, %c0_39], %64 {strides = array<i32>} : memref<8x1xf32, #tpu.memory_space<vmem>>, vector<8x1xf32>,
      %c0_40 = arith.constant 0 : index
      %c0_41 = arith.constant 0 : index
      %66 = vector.load %arg17[%c0_40, %c0_41] : memref<8x1xf32, #tpu.memory_space<vmem>>, vector<8x1xf32>
      tpu.vector_store %arg17[%c0_40, %c0_41], %53 {strides = array<i32>} : memref<8x1xf32, #tpu.memory_space<vmem>>, vector<8x1xf32>,
    } else {
    }
    %c0_i32_5 = arith.constant 0 : i32
    %14 = arith.cmpi eq, %arg0, %c0_i32_5 : i32
    %c0_i32_6 = arith.constant 0 : i32
    %15 = arith.cmpi eq, %arg1, %c0_i32_6 : i32
    %16 = arith.andi %14, %15 : i1
    %17 = arith.extui %16 : i1 to i32
    %c0_i32_7 = arith.constant 0 : i32
    %18 = arith.cmpi ne, %17, %c0_i32_7 : i32
    scf.if %18 {
      %c0 = arith.constant 0 : index
      %c0_15 = arith.constant 0 : index
      %32 = vector.load %arg16[%c0, %c0_15] : memref<8x64xf32, #tpu.memory_space<vmem>>, vector<8x64xf32>
      %33 = math.tanh %32 : vector<8x64xf32>
      %c0_16 = arith.constant 0 : index
      %c0_17 = arith.constant 0 : index
      %34 = vector.load %arg9[%c0_16, %c0_17] : memref<64x64xf32, #tpu.memory_space<vmem>>, vector<64x64xf32>
      %cst = arith.constant dense<0.000000e+00> : vector<8x64xf32>
      %35 = tpu.matmul %33, %34, %cst {dimension_numbers = #tpu.dot_dimension_numbers<[1], [0], [0], [1], [0, 0, 1, 1], [], []>} : vector<8x64xf32>, vector<64x64xf32>, vector<8x64xf32> -> vector<8x64xf32>
      %c0_18 = arith.constant 0 : index
      %c0_19 = arith.constant 0 : index
      %36 = vector.load %arg10[%c0_18, %c0_19] : memref<1x64xf32, #tpu.memory_space<vmem>>, vector<1x64xf32>
      %37 = vector.broadcast %36 : vector<1x64xf32> to vector<8x64xf32>
      %38 = arith.addf %35, %37 : vector<8x64xf32>
      %39 = math.tanh %38 : vector<8x64xf32>
      %c0_20 = arith.constant 0 : index
      %c0_21 = arith.constant 0 : index
      %40 = vector.load %arg11[%c0_20, %c0_21] : memref<64x16xf32, #tpu.memory_space<vmem>>, vector<64x16xf32>
      %cst_22 = arith.constant dense<0.000000e+00> : vector<8x16xf32>
      %41 = tpu.matmul %39, %40, %cst_22 {dimension_numbers = #tpu.dot_dimension_numbers<[1], [0], [0], [1], [0, 0, 1, 1], [], []>} : vector<8x64xf32>, vector<64x16xf32>, vector<8x16xf32> -> vector<8x16xf32>
      %c0_23 = arith.constant 0 : index
      %c0_24 = arith.constant 0 : index
      %42 = vector.load %arg12[%c0_23, %c0_24] : memref<1x16xf32, #tpu.memory_space<vmem>>, vector<1x16xf32>
      %43 = vector.broadcast %42 : vector<1x16xf32> to vector<8x16xf32>
      %44 = arith.addf %41, %43 : vector<8x16xf32>
      %45 = vector.extract_strided_slice %44 {offsets = [0, 0], sizes = [8, 8], strides = [1, 1]} : vector<8x16xf32> to vector<8x8xf32>
      %46 = vector.extract_strided_slice %44 {offsets = [0, 8], sizes = [8, 8], strides = [1, 1]} : vector<8x16xf32> to vector<8x8xf32>
      %47 = vector.shape_cast %46 : vector<8x8xf32> to vector<1x8x8xf32>
      %cst_25 = arith.constant dense<0xFF800000> : vector<1xf32>
      %48 = vector.multi_reduction <maximumf>, %47, %cst_25 [1, 2] : vector<1x8x8xf32> to vector<1xf32>
      %49 = vector.shape_cast %48 : vector<1xf32> to vector<1x1x1xf32>
      %50 = vector.extract %49[0, 0, 0] : f32 from vector<1x1x1xf32>
      %51 = vector.broadcast %50 : f32 to vector<8x8xf32>
      %cst_26 = arith.constant 1.000000e+01 : f32
      %52 = vector.broadcast %cst_26 : f32 to vector<8x8xf32>
      %53 = arith.cmpf ogt, %51, %52 : vector<8x8xf32>
      %54 = vector.shape_cast %46 : vector<8x8xf32> to vector<1x8x8xf32>
      %cst_27 = arith.constant dense<0x7F800000> : vector<1xf32>
      %55 = vector.multi_reduction <minimumf>, %54, %cst_27 [1, 2] : vector<1x8x8xf32> to vector<1xf32>
      %56 = vector.shape_cast %55 : vector<1xf32> to vector<1x1x1xf32>
      %57 = vector.extract %56[0, 0, 0] : f32 from vector<1x1x1xf32>
      %58 = vector.broadcast %57 : f32 to vector<8x8xf32>
      %cst_28 = arith.constant -1.000000e+01 : f32
      %59 = vector.broadcast %cst_28 : f32 to vector<8x8xf32>
      %60 = arith.cmpf olt, %58, %59 : vector<8x8xf32>
      %cst_29 = arith.constant 1.000000e+01 : f32
      %61 = vector.broadcast %cst_29 : f32 to vector<8x8xf32>
      %62 = arith.minimumf %46, %61 : vector<8x8xf32>
      %cst_30 = arith.constant -1.000000e+01 : f32
      %63 = vector.broadcast %cst_30 : f32 to vector<8x8xf32>
      %64 = arith.maximumf %46, %63 : vector<8x8xf32>
      %65 = arith.select %60, %64, %46 : vector<8x8xi1>, vector<8x8xf32>
      %66 = arith.select %53, %62, %65 : vector<8x8xi1>, vector<8x8xf32>
      %cst_31 = arith.constant dense<0xFF800000> : vector<8xf32>
      %67 = vector.multi_reduction <maximumf>, %45, %cst_31 [1] : vector<8x8xf32> to vector<8xf32>
      %68 = vector.shape_cast %67 : vector<8xf32> to vector<8x1xf32>
      %69 = vector.broadcast %68 : vector<8x1xf32> to vector<8x8xf32>
      %70 = arith.subf %45, %69 : vector<8x8xf32>
      %71 = math.exp %70 : vector<8x8xf32>
      %cst_32 = arith.constant dense<0.000000e+00> : vector<8xf32>
      %72 = vector.multi_reduction <add>, %71, %cst_32 [1] : vector<8x8xf32> to vector<8xf32>
      %73 = vector.shape_cast %72 : vector<8xf32> to vector<8x1xf32>
      %74 = vector.broadcast %73 : vector<8x1xf32> to vector<8x8xf32>
      %75 = arith.divf %71, %74 : vector<8x8xf32>
      %c0_33 = arith.constant 0 : index
      %c0_34 = arith.constant 0 : index
      %76 = vector.load %arg19[%c0_33, %c0_34] : memref<8x8xf32, #tpu.memory_space<vmem>>, vector<8x8xf32>
      tpu.vector_store %arg19[%c0_33, %c0_34], %75 {strides = array<i32>} : memref<8x8xf32, #tpu.memory_space<vmem>>, vector<8x8xf32>,
      %c0_35 = arith.constant 0 : index
      %c0_36 = arith.constant 0 : index
      %77 = vector.load %arg6[%c0_35, %c0_36] : memref<8x8xf32, #tpu.memory_space<vmem>>, vector<8x8xf32>
      %78 = arith.subf %45, %77 : vector<8x8xf32>
      %79 = math.exp %66 : vector<8x8xf32>
      %80 = arith.mulf %78, %78 : vector<8x8xf32>
      %81 = arith.addf %79, %80 : vector<8x8xf32>
      %cst_37 = arith.constant 1.00000095 : f32
      %82 = vector.broadcast %cst_37 : f32 to vector<8x8xf32>
      %83 = arith.divf %81, %82 : vector<8x8xf32>
      %cst_38 = arith.constant 1.000000e+00 : f32
      %84 = vector.broadcast %cst_38 : f32 to vector<8x8xf32>
      %85 = arith.subf %83, %84 : vector<8x8xf32>
      %86 = arith.subf %85, %66 : vector<8x8xf32>
      %cst_39 = arith.constant dense<0.000000e+00> : vector<8xf32>
      %87 = vector.multi_reduction <add>, %86, %cst_39 [1] : vector<8x8xf32> to vector<8xf32>
      %88 = vector.shape_cast %87 : vector<8xf32> to vector<8x1xf32>
      %cst_40 = arith.constant 5.000000e-01 : f32
      %89 = vector.broadcast %cst_40 : f32 to vector<8x1xf32>
      %90 = arith.mulf %89, %88 : vector<8x1xf32>
      %91 = vector.shape_cast %90 : vector<8x1xf32> to vector<8x1xf32>
      %92 = vector.broadcast %91 : vector<8x1xf32> to vector<8x128xf32>
      %c0_41 = arith.constant 0 : index
      %c0_42 = arith.constant 0 : index
      %93 = vector.load %arg14[%c0_41, %c0_42] : memref<8x128xf32, #tpu.memory_space<vmem>>, vector<8x128xf32>
      tpu.vector_store %arg14[%c0_41, %c0_42], %92 {strides = array<i32>} : memref<8x128xf32, #tpu.memory_space<vmem>>, vector<8x128xf32>,
      %c0_43 = arith.constant 0 : index
      %c0_44 = arith.constant 0 : index
      %94 = vector.load %arg17[%c0_43, %c0_44] : memref<8x1xf32, #tpu.memory_space<vmem>>, vector<8x1xf32>
      %c0_45 = arith.constant 0 : index
      %c0_46 = arith.constant 0 : index
      %95 = vector.load %arg18[%c0_45, %c0_46] : memref<8x1xf32, #tpu.memory_space<vmem>>, vector<8x1xf32>
      %96 = math.log %95 : vector<8x1xf32>
      %97 = arith.addf %94, %96 : vector<8x1xf32>
      %c0_47 = arith.constant 0 : index
      %c0_48 = arith.constant 0 : index
      %98 = vector.load %arg17[%c0_47, %c0_48] : memref<8x1xf32, #tpu.memory_space<vmem>>, vector<8x1xf32>
      tpu.vector_store %arg17[%c0_47, %c0_48], %97 {strides = array<i32>} : memref<8x1xf32, #tpu.memory_space<vmem>>, vector<8x1xf32>,
    } else {
    }
    %c1_i32 = arith.constant 1 : i32
    %19 = arith.cmpi eq, %arg0, %c1_i32 : i32
    %c0_i32_8 = arith.constant 0 : i32
    %20 = arith.cmpi eq, %arg1, %c0_i32_8 : i32
    %21 = arith.andi %19, %20 : i1
    %22 = arith.extui %21 : i1 to i32
    %c0_i32_9 = arith.constant 0 : i32
    %23 = arith.cmpi ne, %22, %c0_i32_9 : i32
    scf.if %23 {
      %cst = arith.constant 0.000000e+00 : f32
      %32 = vector.broadcast %cst : f32 to vector<8x1xf32>
      %c0 = arith.constant 0 : index
      %c0_15 = arith.constant 0 : index
      %33 = vector.load %arg20[%c0, %c0_15] : memref<8x1xf32, #tpu.memory_space<vmem>>, vector<8x1xf32>
      tpu.vector_store %arg20[%c0, %c0_15], %32 {strides = array<i32>} : memref<8x1xf32, #tpu.memory_space<vmem>>, vector<8x1xf32>,
    } else {
    }
    %c1_i32_10 = arith.constant 1 : i32
    %24 = arith.cmpi eq, %arg0, %c1_i32_10 : i32
    %25 = arith.extui %24 : i1 to i32
    %c0_i32_11 = arith.constant 0 : i32
    %26 = arith.cmpi ne, %25, %c0_i32_11 : i32
    scf.if %26 {
      %32 = arith.index_cast %arg1 : i32 to index
      %c0 = arith.constant 0 : index
      %c0_15 = arith.constant 0 : index
      %33 = vector.load %arg21[%32, %c0, %c0_15] : memref<1x8x256xf32, #tpu.memory_space<vmem>>, vector<1x8x256xf32>
      %34 = vector.shape_cast %33 : vector<1x8x256xf32> to vector<8x256xf32>
      %c0_16 = arith.constant 0 : index
      %c0_17 = arith.constant 0 : index
      %35 = vector.load %arg17[%c0_16, %c0_17] : memref<8x1xf32, #tpu.memory_space<vmem>>, vector<8x1xf32>
      %36 = vector.broadcast %35 : vector<8x1xf32> to vector<8x256xf32>
      %37 = arith.subf %34, %36 : vector<8x256xf32>
      %38 = math.exp %37 : vector<8x256xf32>
      %c0_18 = arith.constant 0 : index
      %c0_19 = arith.constant 0 : index
      %39 = vector.load %arg19[%c0_18, %c0_19] : memref<8x8xf32, #tpu.memory_space<vmem>>, vector<8x8xf32>
      %cst = arith.constant dense<0.000000e+00> : vector<8x256xf32>
      %40 = tpu.matmul %39, %38, %cst {dimension_numbers = #tpu.dot_dimension_numbers<[1], [0], [0], [1], [0, 0, 1, 1], [], []>} : vector<8x8xf32>, vector<8x256xf32>, vector<8x256xf32> -> vector<8x256xf32>
      %41 = math.log %40 : vector<8x256xf32>
      %cst_20 = arith.constant 0.000000e+00 : f32
      %42 = vector.broadcast %cst_20 : f32 to vector<8x256xf32>
      %43 = arith.subf %42, %41 : vector<8x256xf32>
      %c0_21 = arith.constant 0 : index
      %c0_22 = arith.constant 0 : index
      %44 = vector.load %arg3[%c0_21, %c0_22] : memref<8x256xf32, #tpu.memory_space<vmem>>, vector<8x256xf32>
      %45 = arith.mulf %43, %44 : vector<8x256xf32>
      %cst_23 = arith.constant 0.000000e+00 : f32
      %46 = vector.shape_cast %5 : vector<1x256xi1> to vector<1x256xi1>
      %47 = vector.broadcast %46 : vector<1x256xi1> to vector<8x256xi1>
      %48 = vector.broadcast %cst_23 : f32 to vector<8x256xf32>
      %49 = arith.select %47, %45, %48 : vector<8x256xi1>, vector<8x256xf32>
      %c0_24 = arith.constant 0 : index
      %c0_25 = arith.constant 0 : index
      %50 = vector.load %arg20[%c0_24, %c0_25] : memref<8x1xf32, #tpu.memory_space<vmem>>, vector<8x1xf32>
      %cst_26 = arith.constant dense<0.000000e+00> : vector<8xf32>
      %51 = vector.multi_reduction <add>, %49, %cst_26 [1] : vector<8x256xf32> to vector<8xf32>
      %52 = vector.shape_cast %51 : vector<8xf32> to vector<8x1xf32>
      %53 = arith.addf %50, %52 : vector<8x1xf32>
      %c0_27 = arith.constant 0 : index
      %c0_28 = arith.constant 0 : index
      %54 = vector.load %arg20[%c0_27, %c0_28] : memref<8x1xf32, #tpu.memory_space<vmem>>, vector<8x1xf32>
      tpu.vector_store %arg20[%c0_27, %c0_28], %53 {strides = array<i32>} : memref<8x1xf32, #tpu.memory_space<vmem>>, vector<8x1xf32>,
    } else {
    }
    %c1_i32_12 = arith.constant 1 : i32
    %27 = arith.cmpi eq, %arg0, %c1_i32_12 : i32
    %c0_i32_13 = arith.constant 0 : i32
    %28 = arith.cmpi eq, %arg1, %c0_i32_13 : i32
    %29 = arith.andi %27, %28 : i1
    %30 = arith.extui %29 : i1 to i32
    %c0_i32_14 = arith.constant 0 : i32
    %31 = arith.cmpi ne, %30, %c0_i32_14 : i32
    scf.if %31 {
      %c0 = arith.constant 0 : index
      %c0_15 = arith.constant 0 : index
      %32 = vector.load %arg20[%c0, %c0_15] : memref<8x1xf32, #tpu.memory_space<vmem>>, vector<8x1xf32>
      %33 = vector.shape_cast %32 : vector<8x1xf32> to vector<8x1xf32>
      %34 = vector.broadcast %33 : vector<8x1xf32> to vector<8x128xf32>
      %c0_16 = arith.constant 0 : index
      %c0_17 = arith.constant 0 : index
      %35 = vector.load %arg15[%c0_16, %c0_17] : memref<8x128xf32, #tpu.memory_space<vmem>>, vector<8x128xf32>
      tpu.vector_store %arg15[%c0_16, %c0_17], %34 {strides = array<i32>} : memref<8x128xf32, #tpu.memory_space<vmem>>, vector<8x128xf32>,
    } else {
    }
    return
  }
  func.func @transform_0(%arg0: i32, %arg1: i32) -> (i32, i32) {
    %c1_i32 = arith.constant 1 : i32
    %0 = arith.subi %c1_i32, %arg0 : i32
    %1 = arith.muli %0, %arg1 : i32
    %c0_i32 = arith.constant 0 : i32
    %2 = arith.muli %arg0, %c0_i32 : i32
    %3 = arith.addi %1, %2 : i32
    %c0_i32_0 = arith.constant 0 : i32
    %c0_i32_1 = arith.constant 0 : i32
    return %c0_i32_0, %3 : i32, i32
  }
  func.func @transform_1(%arg0: i32, %arg1: i32) -> (i32, i32) {
    %0 = arith.muli %arg0, %arg1 : i32
    %c0_i32 = arith.constant 0 : i32
    %c0_i32_0 = arith.constant 0 : i32
    return %c0_i32, %0 : i32, i32
  }
  func.func @transform_2(%arg0: i32, %arg1: i32) -> (i32, i32) {
    %c1_i32 = arith.constant 1 : i32
    %0 = arith.subi %c1_i32, %arg0 : i32
    %1 = arith.muli %0, %arg1 : i32
    %c0_i32 = arith.constant 0 : i32
    %2 = arith.muli %arg0, %c0_i32 : i32
    %3 = arith.addi %1, %2 : i32
    %c0_i32_0 = arith.constant 0 : i32
    %c0_i32_1 = arith.constant 0 : i32
    return %3, %c0_i32_0 : i32, i32
  }
  func.func @transform_3(%arg0: i32, %arg1: i32) -> (i32, i32) {
    %c1_i32 = arith.constant 1 : i32
    %0 = arith.subi %c1_i32, %arg0 : i32
    %1 = arith.muli %0, %arg1 : i32
    %c0_i32 = arith.constant 0 : i32
    %2 = arith.muli %arg0, %c0_i32 : i32
    %3 = arith.addi %1, %2 : i32
    %c0_i32_0 = arith.constant 0 : i32
    %c0_i32_1 = arith.constant 0 : i32
    return %3, %c0_i32_0 : i32, i32
  }
  func.func @transform_4(%arg0: i32, %arg1: i32) -> (i32, i32) {
    %c0_i32 = arith.constant 0 : i32
    %c0_i32_0 = arith.constant 0 : i32
    %c0_i32_1 = arith.constant 0 : i32
    return %c0_i32, %c0_i32_0 : i32, i32
  }
  func.func @transform_5(%arg0: i32, %arg1: i32) -> (i32, i32) {
    %c0_i32 = arith.constant 0 : i32
    %c0_i32_0 = arith.constant 0 : i32
    %c0_i32_1 = arith.constant 0 : i32
    return %c0_i32, %c0_i32_0 : i32, i32
  }
  func.func @transform_6(%arg0: i32, %arg1: i32) -> (i32, i32) {
    %c0_i32 = arith.constant 0 : i32
    %c0_i32_0 = arith.constant 0 : i32
    %c0_i32_1 = arith.constant 0 : i32
    return %c0_i32, %c0_i32_0 : i32, i32
  }
  func.func @transform_7(%arg0: i32, %arg1: i32) -> (i32, i32) {
    %c0_i32 = arith.constant 0 : i32
    %c0_i32_0 = arith.constant 0 : i32
    %c0_i32_1 = arith.constant 0 : i32
    return %c0_i32, %c0_i32_0 : i32, i32
  }
  func.func @transform_8(%arg0: i32, %arg1: i32) -> (i32, i32) {
    %c0_i32 = arith.constant 0 : i32
    %c0_i32_0 = arith.constant 0 : i32
    %c0_i32_1 = arith.constant 0 : i32
    return %c0_i32, %c0_i32_0 : i32, i32
  }
  func.func @transform_9(%arg0: i32, %arg1: i32) -> (i32, i32) {
    %c0_i32 = arith.constant 0 : i32
    %c0_i32_0 = arith.constant 0 : i32
    %c0_i32_1 = arith.constant 0 : i32
    return %c0_i32, %c0_i32_0 : i32, i32
  }
  func.func @transform_10(%arg0: i32, %arg1: i32) -> (i32, i32) {
    %c0_i32 = arith.constant 0 : i32
    %c0_i32_0 = arith.constant 0 : i32
    %c0_i32_1 = arith.constant 0 : i32
    return %c0_i32, %c0_i32_0 : i32, i32
  }
  func.func @transform_11(%arg0: i32, %arg1: i32) -> (i32, i32) {
    %c0_i32 = arith.constant 0 : i32
    %c0_i32_0 = arith.constant 0 : i32
    %c0_i32_1 = arith.constant 0 : i32
    return %c0_i32, %c0_i32_0 : i32, i32
  }
  func.func @transform_12(%arg0: i32, %arg1: i32) -> (i32, i32) {
    %c0_i32 = arith.constant 0 : i32
    %c0_i32_0 = arith.constant 0 : i32
    %c0_i32_1 = arith.constant 0 : i32
    return %c0_i32, %c0_i32_0 : i32, i32
  }
  func.func @transform_13(%arg0: i32, %arg1: i32) -> (i32, i32) {
    %c0_i32 = arith.constant 0 : i32
    %c0_i32_0 = arith.constant 0 : i32
    %c0_i32_1 = arith.constant 0 : i32
    return %c0_i32, %c0_i32_0 : i32, i32
  }
}

</mosaic_0001>

<llo_original>
// kernel: custom-call.5
$region0: #{custom-call.5}
  %s0 = inlined_call_operand.vmem [shape: bf16[4,2,64], index: 0, kind: output, shape index: {}]

// kernel: custom-call.3
$region0: #{custom-call.3}
  %s0 = inlined_call_operand.vmem [shape: f32[2,64], index: 0, kind: output, shape index: {}]

// kernel: custom-call.2
$region0: #{custom-call.2}
  %s0 = inlined_call_operand.vmem [shape: bf16[2,64], index: 0, kind: output, shape index: {}]

// kernel: custom-call.4
$region0: #{custom-call.4}
  %s0 = inlined_call_operand.vmem [shape: f32[3,2,8], index: 0, kind: output, shape index: {}]

// kernel: mixmedia_forward.2
$region0: #{mixmedia_forward.2}
  #allocation0 [shape = 'u32[]', space=smem, size = 0x4, offset = 0x4, fixed_abs, tag = 'smem constant byte address 0x4 - core index']
  #allocation1 [shape = 'u32[144,128]{1,0:T(1,128)}', space=vmem, size = 0x12000, scoped, tag = 'internal scratch']
  #allocation2 [shape = 'f32[8,128]{1,0:T(8,128)}', space=vmem, size = 0x1000, scoped, tag = 'scratch operand']
  %s0 = inlined_call_operand.vmem [shape: f32[8,512], index: 0, kind: input, shape index: {}]
  %s1 = inlined_call_operand.hbm [shape: bf16[512,128], index: 1, kind: input, shape index: {}]
  %s2 = inlined_call_operand.vmem [shape: f32[16,128], index: 2, kind: output, shape index: {}]
  %s3 = sld [smem:[#allocation0]]
  $region53: #{mixmedia_forward.2} parent=0
    _
  %s5 = ssub.s32 1, %s3
  %s6 = scalar_select 0, %s5, %s3
  $region1: #{mixmedia_forward.2} parent=0
    #allocation3 [shape = 'u8[131072]{0}', space=vmem, size = 0x20000, scoped, tag = 'input window, operand 1']
    #allocation4 [shape = 's32[2]{0}', space=sflag, size = 0x8, scoped, tag = 'scoped memory for mixmedia_forward.2']
    %7 = vsyncpa [#allocation4], 0
    %s8 = scalar_lea.sflag [#allocation4], 1
    %9 = vsyncpa %s8, 0
    loop: start=0, step=1, limit=4
    $region2: #{mixmedia_forward.2} parent=1 // loop_pre_header
      _
    $region3: #{mixmedia_forward.2} parent=1 // loop_header
      %s11 = sphi 0, %s15
      %p12 = scmp.ge.s32.totalorder %s11, 4
      %s18 = sphi 0, %s30
      %s19 = sphi 0, %s26
      %s20 = sphi 0, %s18
      %s21 = sphi 0, %s19
      %s22 = sphi 0, %s20
      %s23 = sphi 0, %s21
      %s35 = sphi 0, %s37
      %s38 = sphi 0, %s35
      %s39 = sphi 0, %s38
      %s55 = sphi 0, %s39
      %s63 = sphi 0, %s65
      %s66 = sphi 0, %s63
      %s67 = sphi 0, %s66
      %s83 = sphi 0, %s67
      %s89 = sphi 0, %s91
      %s92 = sphi 0, %s89
      %s93 = sphi 0, %s92
      %s109 = sphi 0, %s93
    $region4: #{mixmedia_forward.2} parent=1 // loop_header_branch
      %14 = sbr.rel (%p12) target = $region8
    $region5: #{mixmedia_forward.2} parent=1 // loop_body
      %s16 = ssub.s32 %s11, 1
      %s17 = ssub.s32 %s11, 2
      %s24 = sadd.s32 1, %s19
      %p25 = scmp.ge.s32.totalorder %s24, 1
      %s26 = scalar_select %p25, 0, %s24
      %s27 = sadd.s32 1, %s18
      %s28 = scalar_select %p25, %s27, %s18
      %p29 = scmp.ge.s32.totalorder %s28, 2
      %s30 = scalar_select %p29, 0, %s28
      %s31 = sadd.s32 %s18, %s19
      %s32 = sadd.s32 %s30, %s26
      %s33 = ssub.s32 %s31, %s32
      %p34 = scmp.eq.s32.totalorder %s33, 0
      %s36 = sadd.s32 %s35, 1
      %s37 = scalar_select %p34, %s35, %s36
      %p40 = pneg %p34
      %p41 = scmp.eq.s32.totalorder %s11, 1
      %p42 = por %p40, %p41
      %p43 = scmp.ne.s32.totalorder %s35, %s38
      %p44 = scmp.eq.s32.totalorder %s11, 0
      %p45 = por %p43, %p44
      %p46 = scmp.ne.s32.totalorder %s35, %s38
      %p47 = scmp.eq.s32.totalorder %s16, 1
      %p48 = por %p46, %p47
      %p49 = scmp.ne.s32.totalorder %s38, %s39
      %p50 = scmp.eq.s32.totalorder %s16, 0
      %p51 = por %p49, %p50
      %p52 = scmp.ne.s32.totalorder %s38, %s39
      %p53 = scmp.eq.s32.totalorder %s17, 1
      %p54 = por %p52, %p53
      %p56 = scmp.ne.s32.totalorder %s39, %s55
      %p57 = scmp.eq.s32.totalorder %s17, 0
      %p58 = por %p56, %p57
      %s59 = sadd.s32 %s18, %s19
      %s60 = sadd.s32 %s30, %s26
      %s61 = ssub.s32 %s59, %s60
      %p62 = scmp.eq.s32.totalorder %s61, 0
      %s64 = sadd.s32 %s63, 1
      %s65 = scalar_select %p62, %s63, %s64
      %p68 = pneg %p62
      %p69 = scmp.eq.s32.totalorder %s11, 1
      %p70 = por %p68, %p69
      %p71 = scmp.ne.s32.totalorder %s63, %s66
      %p72 = scmp.eq.s32.totalorder %s11, 0
      %p73 = por %p71, %p72
      %p74 = scmp.ne.s32.totalorder %s63, %s66
      %p75 = scmp.eq.s32.totalorder %s16, 1
      %p76 = por %p74, %p75
      %p77 = scmp.ne.s32.totalorder %s66, %s67
      %p78 = scmp.eq.s32.totalorder %s16, 0
      %p79 = por %p77, %p78
      %p80 = scmp.ne.s32.totalorder %s66, %s67
      %p81 = scmp.eq.s32.totalorder %s17, 1
      %p82 = por %p80, %p81
      %p84 = scmp.ne.s32.totalorder %s67, %s83
      %p85 = scmp.eq.s32.totalorder %s17, 0
      %p86 = por %p84, %p85
      %s87 = ssub.s32 %s18, %s30
      %p88 = scmp.eq.s32.totalorder %s87, 0
      %s90 = sadd.s32 %s89, 1
      %s91 = scalar_select %p88, %s89, %s90
      %p94 = pneg %p88
      %p95 = scmp.eq.s32.totalorder %s11, 1
      %p96 = por %p94, %p95
      %p97 = scmp.ne.s32.totalorder %s89, %s92
      %p98 = scmp.eq.s32.totalorder %s11, 0
      %p99 = por %p97, %p98
      %p100 = scmp.ne.s32.totalorder %s89, %s92
      %p101 = scmp.eq.s32.totalorder %s16, 1
      %p102 = por %p100, %p101
      %p103 = scmp.ne.s32.totalorder %s92, %s93
      %p104 = scmp.eq.s32.totalorder %s16, 0
      %p105 = por %p103, %p104
      %p106 = scmp.ne.s32.totalorder %s92, %s93
      %p107 = scmp.eq.s32.totalorder %s17, 1
      %p108 = por %p106, %p107
      %p110 = scmp.ne.s32.totalorder %s93, %s109
      %p111 = scmp.eq.s32.totalorder %s17, 0
      %p112 = por %p110, %p111
      %p113 = scmp.le.s32.totalorder 1, %s11
      %p114 = scmp.lt.s32.totalorder %s11, 3
      %p115 = pnand %p113, %p114
      %p116 = pneg %p115
      // Predicated region
      $region9: #{mixmedia_forward.2} parent=5 // pred_check
        _
      $region10: #{mixmedia_forward.2} parent=5 // pred_check_branch
        %118 = sbr.rel (%p115) target = $region12
      $region11: #{mixmedia_forward.2} parent=5 // pred_region
        %s119 = ssub.s32 %s11, 1
      $region12: #{mixmedia_forward.2} parent=5 // pred_fallthru
        _
      %p120 = scmp.lt.s32.totalorder %s11, 2
      // Predicated region
      $region13: #{mixmedia_forward.2} parent=5 // pred_check
        %p121 = pneg %p120
      $region14: #{mixmedia_forward.2} parent=5 // pred_check_branch
        %123 = sbr.rel (%p121) target = $region16
      $region15: #{mixmedia_forward.2} parent=5 // pred_region
        // Predicated region
        $region17: #{mixmedia_forward.2} parent=15 // pred_check
          %p124 = pneg %p45
        $region18: #{mixmedia_forward.2} parent=15 // pred_check_branch
          %126 = sbr.rel (%p124) target = $region20
        $region19: #{mixmedia_forward.2} parent=15 // pred_region
          %s127 = sadd.s32 %s18, %s19
          %s128 = smul.u32 2, %s127
          %p129 = scmp.lt.s32.totalorder %s128, 3
          %s130 = scalar_select %p129, %s128, 3
          %s131 = smul.addr %s130, 8
          %s132 = scalar_lea.vmem %s0, %s131
          %s133 = sadd.s32 %s18, %s19
          %s134 = smul.u32 2, %s133
        $region20: #{mixmedia_forward.2} parent=15 // pred_fallthru
          _
        // Predicated region
        $region21: #{mixmedia_forward.2} parent=15 // pred_check
          %p135 = pneg %p73
        $region22: #{mixmedia_forward.2} parent=15 // pred_check_branch
          %137 = sbr.rel (%p135) target = $region24
        $region23: #{mixmedia_forward.2} parent=15 // pred_region
          %s138 = sand.u32 %s63, 1
          %s139 = scalar_lea.sflag [#allocation4], %s138
          %s140 = sand.u32 %s63, 1
          %s141 = smul.addr %s140, 128
          %s142 = scalar_lea.vmem [#allocation3], %s141
          %s143 = sadd.s32 %s18, %s19
          %s144 = smul.u32 32, %s143
          %s146 = ssub.s32 2048, 2048
          %147 = vsyncadd %s139, %s146
          %s148 = smul.addr %s144, 64
          %s149 = scalar_lea.hbm %s1, %s148
          %s150 = sshll.u32 %s142, 4
          %s151 = int_to_ptr.vmem [resolvable:$true] %s150
          %156 = dma.hbm_to_vmem [thread:$0]  %s149, 2048, %s151, %s139, 64, 64, 4
        $region24: #{mixmedia_forward.2} parent=15 // pred_fallthru
          _
      $region16: #{mixmedia_forward.2} parent=5 // pred_fallthru
        _
      %p157 = scmp.le.s32.totalorder 1, %s11
      %p158 = scmp.lt.s32.totalorder %s11, 3
      %p159 = pnand %p157, %p158
      %p160 = pneg %p159
      // Predicated region
      $region25: #{mixmedia_forward.2} parent=5 // pred_check
        _
      $region26: #{mixmedia_forward.2} parent=5 // pred_check_branch
        %162 = sbr.rel (%p159) target = $region28
      $region27: #{mixmedia_forward.2} parent=5 // pred_region
        %s163 = ssub.s32 %s11, 1
        %s164 = sand.u32 %s66, 1
        %s165 = scalar_lea.sflag [#allocation4], %s164
        %s166 = sand.u32 %s66, 1
        %s167 = smul.addr %s166, 128
        %s168 = scalar_lea.vmem [#allocation3], %s167
        // Predicated region
        $region29: #{mixmedia_forward.2} parent=27 // pred_check
          %p169 = pneg %p79
        $region30: #{mixmedia_forward.2} parent=27 // pred_check_branch
          %171 = sbr.rel (%p169) target = $region32
        $region31: #{mixmedia_forward.2} parent=27 // pred_region
          %172 = dma.done %s165, 2048
        $region32: #{mixmedia_forward.2} parent=27 // pred_fallthru
          _
        %s173 = sadd.s32 %s20, %s21
        %s174 = smul.u32 2, %s173
        %p175 = scmp.lt.s32.totalorder %s174, 3
        %s176 = scalar_select %p175, %s174, 3
        %s177 = smul.addr %s176, 8
        %s178 = scalar_lea.vmem %s0, %s177
        %p179 = pneg %p51
        %p180 = pneg %p48
        %s181 = sand.u32 %s66, 1
        %s182 = scalar_lea.sflag [#allocation4], %s181
        %s183 = sand.u32 %s66, 1
        %s184 = smul.addr %s183, 128
        %s185 = scalar_lea.vmem [#allocation3], %s184
        %p186 = pneg %p79
        %p187 = pneg %p76
        %p188 = pneg %p105
        %p189 = pneg %p102
        %p190 = scmp.lt.s32.totalorder %s20, 1
        %s191 = scalar_select %p190, %s20, 1
        %s192 = smul.addr %s191, 8
        %s193 = scalar_lea.vmem %s2, %s192
        %s194 = sadd.s32 %s20, %s21
        %s195 = smul.u32 2, %s194
        %p196 = scmp.lt.s32.totalorder %s195, 3
        %s197 = scalar_select %p196, %s195, 3
        %s198 = smul.addr %s197, 8
        %s199 = scalar_lea.vmem %s0, %s198
        %s200 = sadd.s32 %s20, %s21
        %s201 = smul.u32 2, %s200
        %s202 = sadd.s32 %s20, %s21
        %s203 = smul.u32 32, %s202
        %p204 = scmp.lt.s32.totalorder %s20, 1
        %s205 = scalar_select %p204, %s20, 1
        %s206 = smul.addr %s205, 8
        %s207 = scalar_lea.vmem %s2, %s206
        %p209 = scmp.eq.s32.totalorder %s21, 0
        // Predicated region
        $region33: #{mixmedia_forward.2} parent=27 // pred_check
          %p210 = pneg %p209
        $region34: #{mixmedia_forward.2} parent=27 // pred_check_branch
          %212 = sbr.rel (%p210) target = $region36
        $region35: #{mixmedia_forward.2} parent=27 // pred_region
          %213 = vst [vmem:[#allocation2] sm:$0xff] 0.0
        $region36: #{mixmedia_forward.2} parent=27 // pred_fallthru
          _
        %v214 = vld [vmem:[#allocation2] sm:$0xff]
        %v215 = vld [vmem:[%s199] sm:$0xff]
        %v216 = vld [vmem:[%s199 + $0x8] sm:$0xff]
        %v217 = vpack.c.bf16 %v215, %v215
        %v218 = vpack.c.bf16 %v216, %v216
        %v219 = vld [vmem:[%s168] sm:$0xf]
        %v220 = vld [vmem:[%s168 + $0x4] sm:$0xf]
        %v221 = vld [vmem:[%s168 + $0x8] sm:$0xf]
        %v222 = vld [vmem:[%s168 + $0xc] sm:$0xf]
        %v223 = vld [vmem:[%s168 + $0x10] sm:$0xf]
        %v224 = vld [vmem:[%s168 + $0x14] sm:$0xf]
        %v225 = vld [vmem:[%s168 + $0x18] sm:$0xf]
        %v226 = vld [vmem:[%s168 + $0x1c] sm:$0xf]
        %v227 = vld [vmem:[%s168 + $0x20] sm:$0xf]
        %v228 = vld [vmem:[%s168 + $0x24] sm:$0xf]
        %v229 = vld [vmem:[%s168 + $0x28] sm:$0xf]
        %v230 = vld [vmem:[%s168 + $0x2c] sm:$0xf]
        %v231 = vld [vmem:[%s168 + $0x30] sm:$0xf]
        %v232 = vld [vmem:[%s168 + $0x34] sm:$0xf]
        %v233 = vld [vmem:[%s168 + $0x38] sm:$0xf]
        %v234 = vld [vmem:[%s168 + $0x3c] sm:$0xf]
        %v235 = vld [vmem:[%s168 + $0x40] sm:$0xf]
        %v236 = vld [vmem:[%s168 + $0x44] sm:$0xf]
        %v237 = vld [vmem:[%s168 + $0x48] sm:$0xf]
        %v238 = vld [vmem:[%s168 + $0x4c] sm:$0xf]
        %v239 = vld [vmem:[%s168 + $0x50] sm:$0xf]
        %v240 = vld [vmem:[%s168 + $0x54] sm:$0xf]
        %v241 = vld [vmem:[%s168 + $0x58] sm:$0xf]
        %v242 = vld [vmem:[%s168 + $0x5c] sm:$0xf]
        %v243 = vld [vmem:[%s168 + $0x60] sm:$0xf]
        %v244 = vld [vmem:[%s168 + $0x64] sm:$0xf]
        %v245 = vld [vmem:[%s168 + $0x68] sm:$0xf]
        %v246 = vld [vmem:[%s168 + $0x6c] sm:$0xf]
        %v247 = vld [vmem:[%s168 + $0x70] sm:$0xf]
        %v248 = vld [vmem:[%s168 + $0x74] sm:$0xf]
        %v249 = vld [vmem:[%s168 + $0x78] sm:$0xf]
        %v250 = vld [vmem:[%s168 + $0x7c] sm:$0xf]
        %v283 = vunpack.c.l.b16 %v219
        %v284 = vunpack.c.l.b16 %v220
        %v285 = vunpack.c.l.b16 %v221
        %v286 = vunpack.c.l.b16 %v222
        %v287 = vunpack.c.l.b16 %v223
        %v288 = vunpack.c.l.b16 %v224
        %v289 = vunpack.c.l.b16 %v225
        %v290 = vunpack.c.l.b16 %v226
        %v291 = vunpack.c.l.b16 %v227
        %v292 = vunpack.c.l.b16 %v228
        %v293 = vunpack.c.l.b16 %v229
        %v294 = vunpack.c.l.b16 %v230
        %v295 = vunpack.c.l.b16 %v231
        %v296 = vunpack.c.l.b16 %v232
        %v297 = vunpack.c.l.b16 %v233
        %v298 = vunpack.c.l.b16 %v234
        %v299 = vunpack.c.l.b16 %v235
        %v300 = vunpack.c.l.b16 %v236
        %v301 = vunpack.c.l.b16 %v237
        %v302 = vunpack.c.l.b16 %v238
        %v303 = vunpack.c.l.b16 %v239
        %v304 = vunpack.c.l.b16 %v240
        %v305 = vunpack.c.l.b16 %v241
        %v306 = vunpack.c.l.b16 %v242
        %v307 = vunpack.c.l.b16 %v243
        %v308 = vunpack.c.l.b16 %v244
        %v309 = vunpack.c.l.b16 %v245
        %v310 = vunpack.c.l.b16 %v246
        %v311 = vunpack.c.l.b16 %v247
        %v312 = vunpack.c.l.b16 %v248
        %v313 = vunpack.c.l.b16 %v249
        %v314 = vunpack.c.l.b16 %v250
        %v315 = vpack.c.b16 %v284, %v283
        %v316 = vpack.c.b16 %v286, %v285
        %v317 = vpack.c.b16 %v288, %v287
        %v318 = vpack.c.b16 %v290, %v289
        %v319 = vpack.c.b16 %v292, %v291
        %v320 = vpack.c.b16 %v294, %v293
        %v321 = vpack.c.b16 %v296, %v295
        %v322 = vpack.c.b16 %v298, %v297
        %v323 = vpack.c.b16 %v300, %v299
        %v324 = vpack.c.b16 %v302, %v301
        %v325 = vpack.c.b16 %v304, %v303
        %v326 = vpack.c.b16 %v306, %v305
        %v327 = vpack.c.b16 %v308, %v307
        %v328 = vpack.c.b16 %v310, %v309
        %v329 = vpack.c.b16 %v312, %v311
        %v330 = vpack.c.b16 %v314, %v313
        %347 = vmatprep.subr.bf16.mxu0 0
        %348 = vmatpush1.bf16.msra.mxu0 %v322
        %349 = vmatprep.subr.bf16.mxu0 0
        %350 = vmatpush1.bf16.msra.mxu0 %v321
        %351 = vmatprep.subr.bf16.mxu0 0
        %352 = vmatpush1.bf16.msra.mxu0 %v320
        %353 = vmatprep.subr.bf16.mxu0 0
        %354 = vmatpush1.bf16.msra.mxu0 %v319
        %355 = vmatprep.subr.bf16.mxu0 0
        %356 = vmatpush1.bf16.msra.mxu0 %v318
        %357 = vmatprep.subr.bf16.mxu0 0
        %358 = vmatpush1.bf16.msra.mxu0 %v317
        %359 = vmatprep.subr.bf16.mxu0 0
        %360 = vmatpush1.bf16.msra.mxu0 %v316
        %361 = vmatprep.subr.bf16.mxu0 0
        %362 = vmatpush1.bf16.msra.mxu0 %v315
        %363 = vmatprep.subr.bf16.mxu0 0
        %364 = vmatpush2.bf16.msra.mxu0 %v330
        %365 = vmatprep.subr.bf16.mxu0 0
        %366 = vmatpush2.bf16.msra.mxu0 %v329
        %367 = vmatprep.subr.bf16.mxu0 0
        %368 = vmatpush2.bf16.msra.mxu0 %v328
        %369 = vmatprep.subr.bf16.mxu0 0
        %370 = vmatpush2.bf16.msra.mxu0 %v327
        %371 = vmatprep.subr.bf16.mxu0 0
        %372 = vmatpush2.bf16.msra.mxu0 %v326
        %373 = vmatprep.subr.bf16.mxu0 0
        %374 = vmatpush2.bf16.msra.mxu0 %v325
        %375 = vmatprep.subr.bf16.mxu0 0
        %376 = vmatpush2.bf16.msra.mxu0 %v324
        %377 = vmatprep.subr.bf16.mxu0 0
        %378 = vmatpush2.bf16.msra.mxu0 %v323
        %379 = vmatprep.mubr.bf16.mxu0 %v218
        %380 = vmatmul.mubr.bf16.gmra.mxu0 %v217
        %v381 = vpop.f32.mrf.mxu0
        %v382 = vadd.f32 0.0, %v381
        %v383 = vpop.f32.mrf.mxu0
        %v384 = vpop.f32.mrf.mxu0
        %v385 = vpop.f32.mrf.mxu0
        %386 = vdwg.mxu0
        %v387 = vadd.f32 %v214, %v382
        %388 = vst [vmem:[#allocation2] sm:$0xff] %v387
        // Predicated region
        $region37: #{mixmedia_forward.2} parent=27 // pred_check
          %p389 = pneg %p209
        $region38: #{mixmedia_forward.2} parent=27 // pred_check_branch
          %391 = sbr.rel (%p389) target = $region40
        $region39: #{mixmedia_forward.2} parent=27 // pred_region
          %v392 = vld [vmem:[#allocation2] sm:$0xff]
          %393 = vst [vmem:[%s207] sm:$0xff] %v392
        $region40: #{mixmedia_forward.2} parent=27 // pred_fallthru
          _
        %p394 = scmp.lt.s32.totalorder %s20, 1
        %s395 = scalar_select %p394, %s20, 1
        %s396 = smul.addr %s395, 8
        %s397 = scalar_lea.vmem %s2, %s396
        // Predicated region
        $region41: #{mixmedia_forward.2} parent=27 // pred_check
          %p398 = pneg %p102
        $region42: #{mixmedia_forward.2} parent=27 // pred_check_branch
          %400 = sbr.rel (%p398) target = $region44
        $region43: #{mixmedia_forward.2} parent=27 // pred_region
          _
        $region44: #{mixmedia_forward.2} parent=27 // pred_fallthru
          _
      $region28: #{mixmedia_forward.2} parent=5 // pred_fallthru
        _
      %p401 = scmp.le.s32.totalorder 2, %s11
      // Predicated region
      $region45: #{mixmedia_forward.2} parent=5 // pred_check
        %p402 = pneg %p401
      $region46: #{mixmedia_forward.2} parent=5 // pred_check_branch
        %404 = sbr.rel (%p402) target = $region48
      $region47: #{mixmedia_forward.2} parent=5 // pred_region
        %s405 = ssub.s32 %s11, 2
        // Predicated region
        $region49: #{mixmedia_forward.2} parent=47 // pred_check
          %p406 = pneg %p108
        $region50: #{mixmedia_forward.2} parent=47 // pred_check_branch
          %408 = sbr.rel (%p406) target = $region52
        $region51: #{mixmedia_forward.2} parent=47 // pred_region
          %p409 = scmp.lt.s32.totalorder %s22, 1
          %s410 = scalar_select %p409, %s22, 1
          %s411 = smul.addr %s410, 8
          %s412 = scalar_lea.vmem %s2, %s411
        $region52: #{mixmedia_forward.2} parent=47 // pred_fallthru
          _
      $region48: #{mixmedia_forward.2} parent=5 // pred_fallthru
        _
    $region6: #{mixmedia_forward.2} parent=1 // loop_footer
      %s15 = sadd.s32 1, %s11
    $region7: #{mixmedia_forward.2} parent=1 // loop_footer_branch
      %10 = sbr.rel target = $region3
    $region8: #{mixmedia_forward.2} parent=1 // loop_exit
      _
    %413 = vsyncpa [#allocation4], 1
    %s414 = scalar_lea.sflag [#allocation4], 1
    %415 = vsyncpa %s414, 1

// kernel: mixmedia_forward.3
$region0: #{mixmedia_forward.3}
  #allocation0 [shape = 'u32[]', space=smem, size = 0x4, offset = 0x4, fixed_abs, tag = 'smem constant byte address 0x4 - core index']
  #allocation1 [shape = 'u32[144,128]{1,0:T(1,128)}', space=vmem, size = 0x12000, scoped, tag = 'internal scratch']
  #allocation2 [shape = 'f32[8,64]{1,0:T(8,128)}', space=vmem, size = 0x1000, scoped, tag = 'scratch operand']
  #allocation3 [shape = 'f32[8,1]{1,0:T(8,128)}', space=vmem, size = 0x1000, scoped, tag = 'scratch operand']
  #allocation4 [shape = 'f32[8,1]{1,0:T(8,128)}', space=vmem, size = 0x1000, scoped, tag = 'scratch operand']
  #allocation5 [shape = 'f32[8,8]{1,0:T(8,128)}', space=vmem, size = 0x1000, scoped, tag = 'scratch operand']
  #allocation6 [shape = 'f32[8,1]{1,0:T(8,128)}', space=vmem, size = 0x1000, scoped, tag = 'scratch operand']
  #allocation7 [shape = 'f32[1,8,256]{2,1,0:T(8,128)}', space=vmem, size = 0x2000, scoped, tag = 'scratch operand']
  %s0 = inlined_call_operand.vmem [shape: f32[8,256], index: 0, kind: input, shape index: {}]
  %s1 = inlined_call_operand.vmem [shape: f32[8,256], index: 1, kind: input, shape index: {}]
  %s2 = inlined_call_operand.vmem [shape: bf16[256,64], index: 2, kind: input, shape index: {}]
  %s3 = inlined_call_operand.vmem [shape: bf16[256,64], index: 3, kind: input, shape index: {}]
  %s4 = inlined_call_operand.vmem [shape: f32[8,8], index: 4, kind: input, shape index: {}]
  %s5 = inlined_call_operand.vmem [shape: f32[8,64], index: 5, kind: input, shape index: {}]
  %s6 = inlined_call_operand.vmem [shape: f32[1,64], index: 6, kind: input, shape index: {}]
  %s7 = inlined_call_operand.vmem [shape: f32[64,64], index: 7, kind: input, shape index: {}]
  %s8 = inlined_call_operand.vmem [shape: f32[1,64], index: 8, kind: input, shape index: {}]
  %s9 = inlined_call_operand.vmem [shape: f32[64,16], index: 9, kind: input, shape index: {}]
  %s10 = inlined_call_operand.vmem [shape: f32[1,16], index: 10, kind: input, shape index: {}]
  %s11 = inlined_call_operand.vmem [shape: bf16[8,64], index: 11, kind: input, shape index: {}]
  %s12 = inlined_call_operand.vmem [shape: f32[8,128], index: 12, kind: output, shape index: {0}]
  %s13 = inlined_call_operand.vmem [shape: f32[8,128], index: 13, kind: output, shape index: {1}]
  %14 = xla_tuple %s12, %s13
  %s15 = sld [smem:[#allocation0]]
  $region113: #{mixmedia_forward.3} parent=0
    _
  %s17 = ssub.s32 1, %s15
  %s18 = scalar_select 0, %s17, %s15
  loop: start=0, step=1, limit=4
  $region2: #{mixmedia_forward.3} parent=0 // loop_pre_header
    _
  $region3: #{mixmedia_forward.3} parent=0 // loop_header
    %s20 = sphi 0, %s24
    %p21 = scmp.ge.s32.totalorder %s20, 4
    %s27 = sphi 0, %s39
    %s28 = sphi 0, %s35
    %s29 = sphi 0, %s27
    %s30 = sphi 0, %s28
    %s31 = sphi 0, %s29
    %s32 = sphi 0, %s30
    %s46 = sphi 0, %s48
    %s49 = sphi 0, %s46
    %s50 = sphi 0, %s49
    %s66 = sphi 0, %s50
    %s74 = sphi 0, %s76
    %s77 = sphi 0, %s74
    %s78 = sphi 0, %s77
    %s94 = sphi 0, %s78
    %s104 = sphi 0, %s106
    %s107 = sphi 0, %s104
    %s108 = sphi 0, %s107
    %s124 = sphi 0, %s108
    %s134 = sphi 0, %s136
    %s137 = sphi 0, %s134
    %s138 = sphi 0, %s137
    %s154 = sphi 0, %s138
    %s158 = sphi 0, %s158
    %s160 = sphi 0, %s158
    %s161 = sphi 0, %s160
    %s175 = sphi 0, %s161
    %s179 = sphi 0, %s179
    %s181 = sphi 0, %s179
    %s182 = sphi 0, %s181
    %s196 = sphi 0, %s182
    %s200 = sphi 0, %s200
    %s202 = sphi 0, %s200
    %s203 = sphi 0, %s202
    %s217 = sphi 0, %s203
    %s221 = sphi 0, %s221
    %s223 = sphi 0, %s221
    %s224 = sphi 0, %s223
    %s238 = sphi 0, %s224
    %s242 = sphi 0, %s242
    %s244 = sphi 0, %s242
    %s245 = sphi 0, %s244
    %s259 = sphi 0, %s245
    %s263 = sphi 0, %s263
    %s265 = sphi 0, %s263
    %s266 = sphi 0, %s265
    %s280 = sphi 0, %s266
    %s284 = sphi 0, %s284
    %s286 = sphi 0, %s284
    %s287 = sphi 0, %s286
    %s301 = sphi 0, %s287
    %s305 = sphi 0, %s305
    %s307 = sphi 0, %s305
    %s308 = sphi 0, %s307
    %s322 = sphi 0, %s308
    %s326 = sphi 0, %s326
    %s328 = sphi 0, %s326
    %s329 = sphi 0, %s328
    %s343 = sphi 0, %s329
    %s347 = sphi 0, %s347
    %s349 = sphi 0, %s347
    %s350 = sphi 0, %s349
    %s364 = sphi 0, %s350
  $region4: #{mixmedia_forward.3} parent=0 // loop_header_branch
    %23 = sbr.rel (%p21) target = $region8
  $region5: #{mixmedia_forward.3} parent=0 // loop_body
    %s25 = ssub.s32 %s20, 1
    %s26 = ssub.s32 %s20, 2
    %s33 = sadd.s32 1, %s28
    %p34 = scmp.ge.s32.totalorder %s33, 1
    %s35 = scalar_select %p34, 0, %s33
    %s36 = sadd.s32 1, %s27
    %s37 = scalar_select %p34, %s36, %s27
    %p38 = scmp.ge.s32.totalorder %s37, 2
    %s39 = scalar_select %p38, 0, %s37
    %s40 = ssub.s32 1, %s27
    %s41 = smul.u32 %s40, %s28
    %s42 = ssub.s32 1, %s39
    %s43 = smul.u32 %s42, %s35
    %s44 = ssub.s32 %s41, %s43
    %p45 = scmp.eq.s32.totalorder %s44, 0
    %s47 = sadd.s32 %s46, 1
    %s48 = scalar_select %p45, %s46, %s47
    %p51 = pneg %p45
    %p52 = scmp.eq.s32.totalorder %s20, 1
    %p53 = por %p51, %p52
    %p54 = scmp.ne.s32.totalorder %s46, %s49
    %p55 = scmp.eq.s32.totalorder %s20, 0
    %p56 = por %p54, %p55
    %p57 = scmp.ne.s32.totalorder %s46, %s49
    %p58 = scmp.eq.s32.totalorder %s25, 1
    %p59 = por %p57, %p58
    %p60 = scmp.ne.s32.totalorder %s49, %s50
    %p61 = scmp.eq.s32.totalorder %s25, 0
    %p62 = por %p60, %p61
    %p63 = scmp.ne.s32.totalorder %s49, %s50
    %p64 = scmp.eq.s32.totalorder %s26, 1
    %p65 = por %p63, %p64
    %p67 = scmp.ne.s32.totalorder %s50, %s66
    %p68 = scmp.eq.s32.totalorder %s26, 0
    %p69 = por %p67, %p68
    %s70 = smul.u32 %s27, %s28
    %s71 = smul.u32 %s39, %s35
    %s72 = ssub.s32 %s70, %s71
    %p73 = scmp.eq.s32.totalorder %s72, 0
    %s75 = sadd.s32 %s74, 1
    %s76 = scalar_select %p73, %s74, %s75
    %p79 = pneg %p73
    %p80 = scmp.eq.s32.totalorder %s20, 1
    %p81 = por %p79, %p80
    %p82 = scmp.ne.s32.totalorder %s74, %s77
    %p83 = scmp.eq.s32.totalorder %s20, 0
    %p84 = por %p82, %p83
    %p85 = scmp.ne.s32.totalorder %s74, %s77
    %p86 = scmp.eq.s32.totalorder %s25, 1
    %p87 = por %p85, %p86
    %p88 = scmp.ne.s32.totalorder %s77, %s78
    %p89 = scmp.eq.s32.totalorder %s25, 0
    %p90 = por %p88, %p89
    %p91 = scmp.ne.s32.totalorder %s77, %s78
    %p92 = scmp.eq.s32.totalorder %s26, 1
    %p93 = por %p91, %p92
    %p95 = scmp.ne.s32.totalorder %s78, %s94
    %p96 = scmp.eq.s32.totalorder %s26, 0
    %p97 = por %p95, %p96
    %s98 = ssub.s32 1, %s27
    %s99 = smul.u32 %s98, %s28
    %s100 = ssub.s32 1, %s39
    %s101 = smul.u32 %s100, %s35
    %s102 = ssub.s32 %s99, %s101
    %p103 = scmp.eq.s32.totalorder %s102, 0
    %s105 = sadd.s32 %s104, 1
    %s106 = scalar_select %p103, %s104, %s105
    %p109 = pneg %p103
    %p110 = scmp.eq.s32.totalorder %s20, 1
    %p111 = por %p109, %p110
    %p112 = scmp.ne.s32.totalorder %s104, %s107
    %p113 = scmp.eq.s32.totalorder %s20, 0
    %p114 = por %p112, %p113
    %p115 = scmp.ne.s32.totalorder %s104, %s107
    %p116 = scmp.eq.s32.totalorder %s25, 1
    %p117 = por %p115, %p116
    %p118 = scmp.ne.s32.totalorder %s107, %s108
    %p119 = scmp.eq.s32.totalorder %s25, 0
    %p120 = por %p118, %p119
    %p121 = scmp.ne.s32.totalorder %s107, %s108
    %p122 = scmp.eq.s32.totalorder %s26, 1
    %p123 = por %p121, %p122
    %p125 = scmp.ne.s32.totalorder %s108, %s124
    %p126 = scmp.eq.s32.totalorder %s26, 0
    %p127 = por %p125, %p126
    %s128 = ssub.s32 1, %s27
    %s129 = smul.u32 %s128, %s28
    %s130 = ssub.s32 1, %s39
    %s131 = smul.u32 %s130, %s35
    %s132 = ssub.s32 %s129, %s131
    %p133 = scmp.eq.s32.totalorder %s132, 0
    %s135 = sadd.s32 %s134, 1
    %s136 = scalar_select %p133, %s134, %s135
    %p139 = pneg %p133
    %p140 = scmp.eq.s32.totalorder %s20, 1
    %p141 = por %p139, %p140
    %p142 = scmp.ne.s32.totalorder %s134, %s137
    %p143 = scmp.eq.s32.totalorder %s20, 0
    %p144 = por %p142, %p143
    %p145 = scmp.ne.s32.totalorder %s134, %s137
    %p146 = scmp.eq.s32.totalorder %s25, 1
    %p147 = por %p145, %p146
    %p148 = scmp.ne.s32.totalorder %s137, %s138
    %p149 = scmp.eq.s32.totalorder %s25, 0
    %p150 = por %p148, %p149
    %p151 = scmp.ne.s32.totalorder %s137, %s138
    %p152 = scmp.eq.s32.totalorder %s26, 1
    %p153 = por %p151, %p152
    %p155 = scmp.ne.s32.totalorder %s138, %s154
    %p156 = scmp.eq.s32.totalorder %s26, 0
    %p157 = por %p155, %p156
    %s159 = sadd.s32 %s158, 1
    %p162 = scmp.eq.s32.totalorder %s20, 1
    %p163 = scmp.ne.s32.totalorder %s158, %s160
    %p164 = scmp.eq.s32.totalorder %s20, 0
    %p165 = por %p163, %p164
    %p166 = scmp.ne.s32.totalorder %s158, %s160
    %p167 = scmp.eq.s32.totalorder %s25, 1
    %p168 = por %p166, %p167
    %p169 = scmp.ne.s32.totalorder %s160, %s161
    %p170 = scmp.eq.s32.totalorder %s25, 0
    %p171 = por %p169, %p170
    %p172 = scmp.ne.s32.totalorder %s160, %s161
    %p173 = scmp.eq.s32.totalorder %s26, 1
    %p174 = por %p172, %p173
    %p176 = scmp.ne.s32.totalorder %s161, %s175
    %p177 = scmp.eq.s32.totalorder %s26, 0
    %p178 = por %p176, %p177
    %s180 = sadd.s32 %s179, 1
    %p183 = scmp.eq.s32.totalorder %s20, 1
    %p184 = scmp.ne.s32.totalorder %s179, %s181
    %p185 = scmp.eq.s32.totalorder %s20, 0
    %p186 = por %p184, %p185
    %p187 = scmp.ne.s32.totalorder %s179, %s181
    %p188 = scmp.eq.s32.totalorder %s25, 1
    %p189 = por %p187, %p188
    %p190 = scmp.ne.s32.totalorder %s181, %s182
    %p191 = scmp.eq.s32.totalorder %s25, 0
    %p192 = por %p190, %p191
    %p193 = scmp.ne.s32.totalorder %s181, %s182
    %p194 = scmp.eq.s32.totalorder %s26, 1
    %p195 = por %p193, %p194
    %p197 = scmp.ne.s32.totalorder %s182, %s196
    %p198 = scmp.eq.s32.totalorder %s26, 0
    %p199 = por %p197, %p198
    %s201 = sadd.s32 %s200, 1
    %p204 = scmp.eq.s32.totalorder %s20, 1
    %p205 = scmp.ne.s32.totalorder %s200, %s202
    %p206 = scmp.eq.s32.totalorder %s20, 0
    %p207 = por %p205, %p206
    %p208 = scmp.ne.s32.totalorder %s200, %s202
    %p209 = scmp.eq.s32.totalorder %s25, 1
    %p210 = por %p208, %p209
    %p211 = scmp.ne.s32.totalorder %s202, %s203
    %p212 = scmp.eq.s32.totalorder %s25, 0
    %p213 = por %p211, %p212
    %p214 = scmp.ne.s32.totalorder %s202, %s203
    %p215 = scmp.eq.s32.totalorder %s26, 1
    %p216 = por %p214, %p215
    %p218 = scmp.ne.s32.totalorder %s203, %s217
    %p219 = scmp.eq.s32.totalorder %s26, 0
    %p220 = por %p218, %p219
    %s222 = sadd.s32 %s221, 1
    %p225 = scmp.eq.s32.totalorder %s20, 1
    %p226 = scmp.ne.s32.totalorder %s221, %s223
    %p227 = scmp.eq.s32.totalorder %s20, 0
    %p228 = por %p226, %p227
    %p229 = scmp.ne.s32.totalorder %s221, %s223
    %p230 = scmp.eq.s32.totalorder %s25, 1
    %p231 = por %p229, %p230
    %p232 = scmp.ne.s32.totalorder %s223, %s224
    %p233 = scmp.eq.s32.totalorder %s25, 0
    %p234 = por %p232, %p233
    %p235 = scmp.ne.s32.totalorder %s223, %s224
    %p236 = scmp.eq.s32.totalorder %s26, 1
    %p237 = por %p235, %p236
    %p239 = scmp.ne.s32.totalorder %s224, %s238
    %p240 = scmp.eq.s32.totalorder %s26, 0
    %p241 = por %p239, %p240
    %s243 = sadd.s32 %s242, 1
    %p246 = scmp.eq.s32.totalorder %s20, 1
    %p247 = scmp.ne.s32.totalorder %s242, %s244
    %p248 = scmp.eq.s32.totalorder %s20, 0
    %p249 = por %p247, %p248
    %p250 = scmp.ne.s32.totalorder %s242, %s244
    %p251 = scmp.eq.s32.totalorder %s25, 1
    %p252 = por %p250, %p251
    %p253 = scmp.ne.s32.totalorder %s244, %s245
    %p254 = scmp.eq.s32.totalorder %s25, 0
    %p255 = por %p253, %p254
    %p256 = scmp.ne.s32.totalorder %s244, %s245
    %p257 = scmp.eq.s32.totalorder %s26, 1
    %p258 = por %p256, %p257
    %p260 = scmp.ne.s32.totalorder %s245, %s259
    %p261 = scmp.eq.s32.totalorder %s26, 0
    %p262 = por %p260, %p261
    %s264 = sadd.s32 %s263, 1
    %p267 = scmp.eq.s32.totalorder %s20, 1
    %p268 = scmp.ne.s32.totalorder %s263, %s265
    %p269 = scmp.eq.s32.totalorder %s20, 0
    %p270 = por %p268, %p269
    %p271 = scmp.ne.s32.totalorder %s263, %s265
    %p272 = scmp.eq.s32.totalorder %s25, 1
    %p273 = por %p271, %p272
    %p274 = scmp.ne.s32.totalorder %s265, %s266
    %p275 = scmp.eq.s32.totalorder %s25, 0
    %p276 = por %p274, %p275
    %p277 = scmp.ne.s32.totalorder %s265, %s266
    %p278 = scmp.eq.s32.totalorder %s26, 1
    %p279 = por %p277, %p278
    %p281 = scmp.ne.s32.totalorder %s266, %s280
    %p282 = scmp.eq.s32.totalorder %s26, 0
    %p283 = por %p281, %p282
    %s285 = sadd.s32 %s284, 1
    %p288 = scmp.eq.s32.totalorder %s20, 1
    %p289 = scmp.ne.s32.totalorder %s284, %s286
    %p290 = scmp.eq.s32.totalorder %s20, 0
    %p291 = por %p289, %p290
    %p292 = scmp.ne.s32.totalorder %s284, %s286
    %p293 = scmp.eq.s32.totalorder %s25, 1
    %p294 = por %p292, %p293
    %p295 = scmp.ne.s32.totalorder %s286, %s287
    %p296 = scmp.eq.s32.totalorder %s25, 0
    %p297 = por %p295, %p296
    %p298 = scmp.ne.s32.totalorder %s286, %s287
    %p299 = scmp.eq.s32.totalorder %s26, 1
    %p300 = por %p298, %p299
    %p302 = scmp.ne.s32.totalorder %s287, %s301
    %p303 = scmp.eq.s32.totalorder %s26, 0
    %p304 = por %p302, %p303
    %s306 = sadd.s32 %s305, 1
    %p309 = scmp.eq.s32.totalorder %s20, 1
    %p310 = scmp.ne.s32.totalorder %s305, %s307
    %p311 = scmp.eq.s32.totalorder %s20, 0
    %p312 = por %p310, %p311
    %p313 = scmp.ne.s32.totalorder %s305, %s307
    %p314 = scmp.eq.s32.totalorder %s25, 1
    %p315 = por %p313, %p314
    %p316 = scmp.ne.s32.totalorder %s307, %s308
    %p317 = scmp.eq.s32.totalorder %s25, 0
    %p318 = por %p316, %p317
    %p319 = scmp.ne.s32.totalorder %s307, %s308
    %p320 = scmp.eq.s32.totalorder %s26, 1
    %p321 = por %p319, %p320
    %p323 = scmp.ne.s32.totalorder %s308, %s322
    %p324 = scmp.eq.s32.totalorder %s26, 0
    %p325 = por %p323, %p324
    %s327 = sadd.s32 %s326, 1
    %p330 = scmp.eq.s32.totalorder %s20, 1
    %p331 = scmp.ne.s32.totalorder %s326, %s328
    %p332 = scmp.eq.s32.totalorder %s20, 0
    %p333 = por %p331, %p332
    %p334 = scmp.ne.s32.totalorder %s326, %s328
    %p335 = scmp.eq.s32.totalorder %s25, 1
    %p336 = por %p334, %p335
    %p337 = scmp.ne.s32.totalorder %s328, %s329
    %p338 = scmp.eq.s32.totalorder %s25, 0
    %p339 = por %p337, %p338
    %p340 = scmp.ne.s32.totalorder %s328, %s329
    %p341 = scmp.eq.s32.totalorder %s26, 1
    %p342 = por %p340, %p341
    %p344 = scmp.ne.s32.totalorder %s329, %s343
    %p345 = scmp.eq.s32.totalorder %s26, 0
    %p346 = por %p344, %p345
    %s348 = sadd.s32 %s347, 1
    %p351 = scmp.eq.s32.totalorder %s20, 1
    %p352 = scmp.ne.s32.totalorder %s347, %s349
    %p353 = scmp.eq.s32.totalorder %s20, 0
    %p354 = por %p352, %p353
    %p355 = scmp.ne.s32.totalorder %s347, %s349
    %p356 = scmp.eq.s32.totalorder %s25, 1
    %p357 = por %p355, %p356
    %p358 = scmp.ne.s32.totalorder %s349, %s350
    %p359 = scmp.eq.s32.totalorder %s25, 0
    %p360 = por %p358, %p359
    %p361 = scmp.ne.s32.totalorder %s349, %s350
    %p362 = scmp.eq.s32.totalorder %s26, 1
    %p363 = por %p361, %p362
    %p365 = scmp.ne.s32.totalorder %s350, %s364
    %p366 = scmp.eq.s32.totalorder %s26, 0
    %p367 = por %p365, %p366
    %p368 = scmp.le.s32.totalorder 1, %s20
    %p369 = scmp.lt.s32.totalorder %s20, 3
    %p370 = pnand %p368, %p369
    %p371 = pneg %p370
    // Predicated region
    $region9: #{mixmedia_forward.3} parent=5 // pred_check
      _
    $region10: #{mixmedia_forward.3} parent=5 // pred_check_branch
      %373 = sbr.rel (%p370) target = $region12
    $region11: #{mixmedia_forward.3} parent=5 // pred_region
      %s374 = ssub.s32 %s20, 1
      // Predicated region
      $region13: #{mixmedia_forward.3} parent=11 // pred_check
        %p375 = pneg %p171
      $region14: #{mixmedia_forward.3} parent=11 // pred_check_branch
        %377 = sbr.rel (%p375) target = $region16
      $region15: #{mixmedia_forward.3} parent=11 // pred_region
        _
      $region16: #{mixmedia_forward.3} parent=11 // pred_fallthru
        _
      // Predicated region
      $region17: #{mixmedia_forward.3} parent=11 // pred_check
        %p378 = pneg %p192
      $region18: #{mixmedia_forward.3} parent=11 // pred_check_branch
        %380 = sbr.rel (%p378) target = $region20
      $region19: #{mixmedia_forward.3} parent=11 // pred_region
        _
      $region20: #{mixmedia_forward.3} parent=11 // pred_fallthru
        _
      // Predicated region
      $region21: #{mixmedia_forward.3} parent=11 // pred_check
        %p381 = pneg %p213
      $region22: #{mixmedia_forward.3} parent=11 // pred_check_branch
        %383 = sbr.rel (%p381) target = $region24
      $region23: #{mixmedia_forward.3} parent=11 // pred_region
        _
      $region24: #{mixmedia_forward.3} parent=11 // pred_fallthru
        _
      // Predicated region
      $region25: #{mixmedia_forward.3} parent=11 // pred_check
        %p384 = pneg %p234
      $region26: #{mixmedia_forward.3} parent=11 // pred_check_branch
        %386 = sbr.rel (%p384) target = $region28
      $region27: #{mixmedia_forward.3} parent=11 // pred_region
        _
      $region28: #{mixmedia_forward.3} parent=11 // pred_fallthru
        _
      // Predicated region
      $region29: #{mixmedia_forward.3} parent=11 // pred_check
        %p387 = pneg %p255
      $region30: #{mixmedia_forward.3} parent=11 // pred_check_branch
        %389 = sbr.rel (%p387) target = $region32
      $region31: #{mixmedia_forward.3} parent=11 // pred_region
        _
      $region32: #{mixmedia_forward.3} parent=11 // pred_fallthru
        _
      // Predicated region
      $region33: #{mixmedia_forward.3} parent=11 // pred_check
        %p390 = pneg %p276
      $region34: #{mixmedia_forward.3} parent=11 // pred_check_branch
        %392 = sbr.rel (%p390) target = $region36
      $region35: #{mixmedia_forward.3} parent=11 // pred_region
        _
      $region36: #{mixmedia_forward.3} parent=11 // pred_fallthru
        _
      // Predicated region
      $region37: #{mixmedia_forward.3} parent=11 // pred_check
        %p393 = pneg %p297
      $region38: #{mixmedia_forward.3} parent=11 // pred_check_branch
        %395 = sbr.rel (%p393) target = $region40
      $region39: #{mixmedia_forward.3} parent=11 // pred_region
        _
      $region40: #{mixmedia_forward.3} parent=11 // pred_fallthru
        _
      // Predicated region
      $region41: #{mixmedia_forward.3} parent=11 // pred_check
        %p396 = pneg %p318
      $region42: #{mixmedia_forward.3} parent=11 // pred_check_branch
        %398 = sbr.rel (%p396) target = $region44
      $region43: #{mixmedia_forward.3} parent=11 // pred_region
        _
      $region44: #{mixmedia_forward.3} parent=11 // pred_fallthru
        _
    $region12: #{mixmedia_forward.3} parent=5 // pred_fallthru
      _
    %p399 = scmp.lt.s32.totalorder %s20, 2
    // Predicated region
    $region45: #{mixmedia_forward.3} parent=5 // pred_check
      %p400 = pneg %p399
    $region46: #{mixmedia_forward.3} parent=5 // pred_check_branch
      %402 = sbr.rel (%p400) target = $region48
    $region47: #{mixmedia_forward.3} parent=5 // pred_region
      // Predicated region
      $region49: #{mixmedia_forward.3} parent=47 // pred_check
        %p403 = pneg %p56
      $region50: #{mixmedia_forward.3} parent=47 // pred_check_branch
        %405 = sbr.rel (%p403) target = $region52
      $region51: #{mixmedia_forward.3} parent=47 // pred_region
        %s406 = ssub.s32 1, %s27
        %s407 = smul.u32 %s406, %s28
        %s408 = smul.u32 2, %s407
        %p409 = scmp.lt.s32.totalorder %s408, 1
        %s410 = scalar_select %p409, %s408, 1
        %s411 = smul.addr %s410, 8
        %s412 = scalar_lea.vmem %s0, %s411
        %s413 = ssub.s32 1, %s27
        %s414 = smul.u32 %s413, %s28
        %s415 = smul.u32 2, %s414
      $region52: #{mixmedia_forward.3} parent=47 // pred_fallthru
        _
      // Predicated region
      $region53: #{mixmedia_forward.3} parent=47 // pred_check
        %p416 = pneg %p84
      $region54: #{mixmedia_forward.3} parent=47 // pred_check_branch
        %418 = sbr.rel (%p416) target = $region56
      $region55: #{mixmedia_forward.3} parent=47 // pred_region
        %s419 = smul.u32 %s27, %s28
        %s420 = smul.u32 2, %s419
        %p421 = scmp.lt.s32.totalorder %s420, 1
        %s422 = scalar_select %p421, %s420, 1
        %s423 = smul.addr %s422, 8
        %s424 = scalar_lea.vmem %s1, %s423
        %s425 = smul.u32 %s27, %s28
        %s426 = smul.u32 2, %s425
      $region56: #{mixmedia_forward.3} parent=47 // pred_fallthru
        _
      // Predicated region
      $region57: #{mixmedia_forward.3} parent=47 // pred_check
        %p427 = pneg %p114
      $region58: #{mixmedia_forward.3} parent=47 // pred_check_branch
        %429 = sbr.rel (%p427) target = $region60
      $region59: #{mixmedia_forward.3} parent=47 // pred_region
        %s430 = ssub.s32 1, %s27
        %s431 = smul.u32 %s430, %s28
        %s432 = smul.u32 32, %s431
        %p433 = scmp.lt.s32.totalorder %s432, 31
        %s434 = scalar_select %p433, %s432, 31
        %s435 = smul.addr %s434, 4
        %s436 = scalar_lea.vmem %s2, %s435
        %s437 = ssub.s32 1, %s27
        %s438 = smul.u32 %s437, %s28
        %s439 = smul.u32 32, %s438
      $region60: #{mixmedia_forward.3} parent=47 // pred_fallthru
        _
      // Predicated region
      $region61: #{mixmedia_forward.3} parent=47 // pred_check
        %p440 = pneg %p144
      $region62: #{mixmedia_forward.3} parent=47 // pred_check_branch
        %442 = sbr.rel (%p440) target = $region64
      $region63: #{mixmedia_forward.3} parent=47 // pred_region
        %s443 = ssub.s32 1, %s27
        %s444 = smul.u32 %s443, %s28
        %s445 = smul.u32 32, %s444
        %p446 = scmp.lt.s32.totalorder %s445, 31
        %s447 = scalar_select %p446, %s445, 31
        %s448 = smul.addr %s447, 4
        %s449 = scalar_lea.vmem %s3, %s448
        %s450 = ssub.s32 1, %s27
        %s451 = smul.u32 %s450, %s28
        %s452 = smul.u32 32, %s451
      $region64: #{mixmedia_forward.3} parent=47 // pred_fallthru
        _
    $region48: #{mixmedia_forward.3} parent=5 // pred_fallthru
      _
    %p453 = scmp.le.s32.totalorder 1, %s20
    %p454 = scmp.lt.s32.totalorder %s20, 3
    %p455 = pnand %p453, %p454
    %p456 = pneg %p455
    // Predicated region
    $region65: #{mixmedia_forward.3} parent=5 // pred_check
      _
    $region66: #{mixmedia_forward.3} parent=5 // pred_check_branch
      %458 = sbr.rel (%p455) target = $region68
    $region67: #{mixmedia_forward.3} parent=5 // pred_region
      %s459 = ssub.s32 %s20, 1
      %s460 = ssub.s32 1, %s29
      %s461 = smul.u32 %s460, %s30
      %s462 = smul.u32 2, %s461
      %p463 = scmp.lt.s32.totalorder %s462, 1
      %s464 = scalar_select %p463, %s462, 1
      %s465 = smul.addr %s464, 8
      %s466 = scalar_lea.vmem %s0, %s465
      %p467 = pneg %p62
      %p468 = pneg %p59
      %s469 = smul.u32 %s29, %s30
      %s470 = smul.u32 2, %s469
      %p471 = scmp.lt.s32.totalorder %s470, 1
      %s472 = scalar_select %p471, %s470, 1
      %s473 = smul.addr %s472, 8
      %s474 = scalar_lea.vmem %s1, %s473
      %p475 = pneg %p90
      %p476 = pneg %p87
      %s477 = ssub.s32 1, %s29
      %s478 = smul.u32 %s477, %s30
      %s479 = smul.u32 32, %s478
      %p480 = scmp.lt.s32.totalorder %s479, 31
      %s481 = scalar_select %p480, %s479, 31
      %s482 = smul.addr %s481, 4
      %s483 = scalar_lea.vmem %s2, %s482
      %p484 = pneg %p120
      %p485 = pneg %p117
      %s486 = ssub.s32 1, %s29
      %s487 = smul.u32 %s486, %s30
      %s488 = smul.u32 32, %s487
      %p489 = scmp.lt.s32.totalorder %s488, 31
      %s490 = scalar_select %p489, %s488, 31
      %s491 = smul.addr %s490, 4
      %s492 = scalar_lea.vmem %s3, %s491
      %p493 = pneg %p150
      %p494 = pneg %p147
      %p495 = pneg %p171
      %p496 = pneg %p168
      %p497 = pneg %p192
      %p498 = pneg %p189
      %p499 = pneg %p213
      %p500 = pneg %p210
      %p501 = pneg %p234
      %p502 = pneg %p231
      %p503 = pneg %p255
      %p504 = pneg %p252
      %p505 = pneg %p276
      %p506 = pneg %p273
      %p507 = pneg %p297
      %p508 = pneg %p294
      %p509 = pneg %p318
      %p510 = pneg %p315
      %p511 = pneg %p339
      %p512 = pneg %p336
      %p513 = pneg %p360
      %p514 = pneg %p357
      %s515 = ssub.s32 1, %s29
      %s516 = smul.u32 %s515, %s30
      %s517 = smul.u32 2, %s516
      %p518 = scmp.lt.s32.totalorder %s517, 1
      %s519 = scalar_select %p518, %s517, 1
      %s520 = smul.addr %s519, 8
      %s521 = scalar_lea.vmem %s0, %s520
      %s522 = ssub.s32 1, %s29
      %s523 = smul.u32 %s522, %s30
      %s524 = smul.u32 2, %s523
      %s525 = smul.u32 %s29, %s30
      %s526 = smul.u32 2, %s525
      %p527 = scmp.lt.s32.totalorder %s526, 1
      %s528 = scalar_select %p527, %s526, 1
      %s529 = smul.addr %s528, 8
      %s530 = scalar_lea.vmem %s1, %s529
      %s531 = smul.u32 %s29, %s30
      %s532 = smul.u32 2, %s531
      %s533 = ssub.s32 1, %s29
      %s534 = smul.u32 %s533, %s30
      %s535 = smul.u32 32, %s534
      %p536 = scmp.lt.s32.totalorder %s535, 31
      %s537 = scalar_select %p536, %s535, 31
      %s538 = smul.addr %s537, 4
      %s539 = scalar_lea.vmem %s2, %s538
      %s540 = ssub.s32 1, %s29
      %s541 = smul.u32 %s540, %s30
      %s542 = smul.u32 32, %s541
      %s543 = ssub.s32 1, %s29
      %s544 = smul.u32 %s543, %s30
      %s545 = smul.u32 32, %s544
      %p546 = scmp.lt.s32.totalorder %s545, 31
      %s547 = scalar_select %p546, %s545, 31
      %s548 = smul.addr %s547, 4
      %s549 = scalar_lea.vmem %s3, %s548
      %s550 = ssub.s32 1, %s29
      %s551 = smul.u32 %s550, %s30
      %s552 = smul.u32 32, %s551
      %v554 = vlaneseq
      %v555 = vand.u32 %v554, 127
      %v556 = vadd.s32 %v555, 128
      %s557 = smul.u32 %s30, 256
      %v558 = vstv %s557
      %v559 = vadd.s32 %v555, %v558
      %v560 = vadd.s32 %v556, %v558
      %vm561 = vcmp.lt.s32.totalorder %v559, 256
      %vm562 = vcmp.lt.s32.totalorder %v560, 256
      %p563 = scmp.eq.s32.totalorder %s29, 0
      %p564 = scmp.eq.s32.totalorder %s30, 0
      %p565 = pnand %p563, %p564
      %p566 = pneg %p565
      // Predicated region
      $region69: #{mixmedia_forward.3} parent=67 // pred_check
        _
      $region70: #{mixmedia_forward.3} parent=67 // pred_check_branch
        %568 = sbr.rel (%p565) target = $region72
      $region71: #{mixmedia_forward.3} parent=67 // pred_region
        %v569 = vld [vmem:[%s4] sm:$0xff]
        %v570 = vld [vmem:[%s5] sm:$0xff]
        %v571 = vld [vmem:[%s6] sm:$0x1]
        %v573 = vlaneseq
        %v574 = vshrl.u32 %v573, 7
        %v575 = vsub.s32 0, %v574
        %v576 = vrot.slane %v571, %v575
        %vm578 = vcmask 64512
        %v580 = vsel %vm578, %v569, 0
        %582 = vmatprep.subr.mxu0 0.0
        %583 = vmatpush1.msra.mxu0 0.0
        %584 = vmatprep.subr.mxu0 0.0
        %585 = vmatpush1.msra.mxu0 0.0
        %586 = vmatprep.subr.mxu0 0.0
        %587 = vmatpush1.msra.mxu0 0.0
        %588 = vmatprep.subr.mxu0 0.0
        %589 = vmatpush1.msra.mxu0 0.0
        %590 = vmatprep.subr.mxu0 0.0
        %591 = vmatpush1.msra.mxu0 0.0
        %592 = vmatprep.subr.mxu0 0.0
        %593 = vmatpush1.msra.mxu0 0.0
        %594 = vmatprep.subr.mxu0 0.0
        %595 = vmatpush1.msra.mxu0 0.0
        %596 = vmatprep.subr.mxu0 0.0
        %597 = vmatpush1.msra.mxu0 0.0
        %598 = vmatprep.subr.mxu0 0.0
        %599 = vmatpush1.msra.mxu0 0.0
        %600 = vmatprep.subr.mxu0 0.0
        %601 = vmatpush1.msra.mxu0 0.0
        %602 = vmatprep.subr.mxu0 0.0
        %603 = vmatpush1.msra.mxu0 0.0
        %604 = vmatprep.subr.mxu0 0.0
        %605 = vmatpush1.msra.mxu0 0.0
        %606 = vmatprep.subr.mxu0 0.0
        %607 = vmatpush1.msra.mxu0 0.0
        %608 = vmatprep.subr.mxu0 0.0
        %609 = vmatpush1.msra.mxu0 0.0
        %610 = vmatprep.subr.mxu0 0.0
        %611 = vmatpush1.msra.mxu0 0.0
        %612 = vmatprep.subr.mxu0 0.0
        %613 = vmatpush1.msra.mxu0 %v570
        %614 = vmatprep.subr.mxu0 0.0
        %615 = vmatpush2.msra.mxu0 0.0
        %616 = vmatprep.subr.mxu0 0.0
        %617 = vmatpush2.msra.mxu0 0.0
        %618 = vmatprep.subr.mxu0 0.0
        %619 = vmatpush2.msra.mxu0 0.0
        %620 = vmatprep.subr.mxu0 0.0
        %621 = vmatpush2.msra.mxu0 0.0
        %622 = vmatprep.subr.mxu0 0.0
        %623 = vmatpush2.msra.mxu0 0.0
        %624 = vmatprep.subr.mxu0 0.0
        %625 = vmatpush2.msra.mxu0 0.0
        %626 = vmatprep.subr.mxu0 0.0
        %627 = vmatpush2.msra.mxu0 0.0
        %628 = vmatprep.subr.mxu0 0.0
        %629 = vmatpush2.msra.mxu0 0.0
        %630 = vmatprep.subr.mxu0 0.0
        %631 = vmatpush2.msra.mxu0 0.0
        %632 = vmatprep.subr.mxu0 0.0
        %633 = vmatpush2.msra.mxu0 0.0
        %634 = vmatprep.subr.mxu0 0.0
        %635 = vmatpush2.msra.mxu0 0.0
        %636 = vmatprep.subr.mxu0 0.0
        %637 = vmatpush2.msra.mxu0 0.0
        %638 = vmatprep.subr.mxu0 0.0
        %639 = vmatpush2.msra.mxu0 0.0
        %640 = vmatprep.subr.mxu0 0.0
        %641 = vmatpush2.msra.mxu0 0.0
        %642 = vmatprep.subr.mxu0 0.0
        %643 = vmatpush2.msra.mxu0 0.0
        %644 = vmatprep.subr.mxu0 0.0
        %645 = vmatpush2.msra.mxu0 0.0
        %646 = vmatprep.mubr.f32.mxu0 0.0
        %647 = vmatmul.mubr.f32.gmra.mxu0 %v580
        %v648 = vpop.f32.mrf.mxu0
        %v649 = vadd.f32 %v576, %v648
        %v650 = vpop.f32.mrf.mxu0
        %651 = vdwg.mxu0
        %vm652 = vcmask 523264
        %653 = vst.msk [vmem:[#allocation2] sm:$0xff] %vm652, %v649
        %vm654 = vcmask 7168
        %655 = vst.msk [vmem:[#allocation3] sm:$0xff] %vm654, -inf
        %656 = vst.msk [vmem:[#allocation4] sm:$0xff] %vm654, 0.0
      $region72: #{mixmedia_forward.3} parent=67 // pred_fallthru
        _
      // Predicated region
      $region73: #{mixmedia_forward.3} parent=67 // pred_check
        %p657 = pneg %p563
      $region74: #{mixmedia_forward.3} parent=67 // pred_check_branch
        %659 = sbr.rel (%p657) target = $region76
      $region75: #{mixmedia_forward.3} parent=67 // pred_region
        %v660 = vld [vmem:[#allocation2] sm:$0xff]
        %v661 = vld [vmem:[%s521] sm:$0xff]
        %v662 = vld [vmem:[%s521 + $0x8] sm:$0xff]
        %v663 = vpack.c.bf16 %v661, %v661
        %v664 = vpack.c.bf16 %v662, %v662
        %v665 = vld [vmem:[%s539] sm:$0xf]
        %v666 = vld [vmem:[%s539 + $0x4] sm:$0xf]
        %v667 = vld [vmem:[%s539 + $0x8] sm:$0xf]
        %v668 = vld [vmem:[%s539 + $0xc] sm:$0xf]
        %v669 = vld [vmem:[%s539 + $0x10] sm:$0xf]
        %v670 = vld [vmem:[%s539 + $0x14] sm:$0xf]
        %v671 = vld [vmem:[%s539 + $0x18] sm:$0xf]
        %v672 = vld [vmem:[%s539 + $0x1c] sm:$0xf]
        %v673 = vld [vmem:[%s539 + $0x20] sm:$0xf]
        %v674 = vld [vmem:[%s539 + $0x24] sm:$0xf]
        %v675 = vld [vmem:[%s539 + $0x28] sm:$0xf]
        %v676 = vld [vmem:[%s539 + $0x2c] sm:$0xf]
        %v677 = vld [vmem:[%s539 + $0x30] sm:$0xf]
        %v678 = vld [vmem:[%s539 + $0x34] sm:$0xf]
        %v679 = vld [vmem:[%s539 + $0x38] sm:$0xf]
        %v680 = vld [vmem:[%s539 + $0x3c] sm:$0xf]
        %v681 = vld [vmem:[%s539 + $0x40] sm:$0xf]
        %v682 = vld [vmem:[%s539 + $0x44] sm:$0xf]
        %v683 = vld [vmem:[%s539 + $0x48] sm:$0xf]
        %v684 = vld [vmem:[%s539 + $0x4c] sm:$0xf]
        %v685 = vld [vmem:[%s539 + $0x50] sm:$0xf]
        %v686 = vld [vmem:[%s539 + $0x54] sm:$0xf]
        %v687 = vld [vmem:[%s539 + $0x58] sm:$0xf]
        %v688 = vld [vmem:[%s539 + $0x5c] sm:$0xf]
        %v689 = vld [vmem:[%s539 + $0x60] sm:$0xf]
        %v690 = vld [vmem:[%s539 + $0x64] sm:$0xf]
        %v691 = vld [vmem:[%s539 + $0x68] sm:$0xf]
        %v692 = vld [vmem:[%s539 + $0x6c] sm:$0xf]
        %v693 = vld [vmem:[%s539 + $0x70] sm:$0xf]
        %v694 = vld [vmem:[%s539 + $0x74] sm:$0xf]
        %v695 = vld [vmem:[%s539 + $0x78] sm:$0xf]
        %v696 = vld [vmem:[%s539 + $0x7c] sm:$0xf]
        %v729 = vunpack.c.l.b16 %v665
        %v730 = vunpack.c.l.b16 %v666
        %v731 = vunpack.c.l.b16 %v667
        %v732 = vunpack.c.l.b16 %v668
        %v733 = vunpack.c.l.b16 %v669
        %v734 = vunpack.c.l.b16 %v670
        %v735 = vunpack.c.l.b16 %v671
        %v736 = vunpack.c.l.b16 %v672
        %v737 = vunpack.c.l.b16 %v673
        %v738 = vunpack.c.l.b16 %v674
        %v739 = vunpack.c.l.b16 %v675
        %v740 = vunpack.c.l.b16 %v676
        %v741 = vunpack.c.l.b16 %v677
        %v742 = vunpack.c.l.b16 %v678
        %v743 = vunpack.c.l.b16 %v679
        %v744 = vunpack.c.l.b16 %v680
        %v745 = vunpack.c.l.b16 %v681
        %v746 = vunpack.c.l.b16 %v682
        %v747 = vunpack.c.l.b16 %v683
        %v748 = vunpack.c.l.b16 %v684
        %v749 = vunpack.c.l.b16 %v685
        %v750 = vunpack.c.l.b16 %v686
        %v751 = vunpack.c.l.b16 %v687
        %v752 = vunpack.c.l.b16 %v688
        %v753 = vunpack.c.l.b16 %v689
        %v754 = vunpack.c.l.b16 %v690
        %v755 = vunpack.c.l.b16 %v691
        %v756 = vunpack.c.l.b16 %v692
        %v757 = vunpack.c.l.b16 %v693
        %v758 = vunpack.c.l.b16 %v694
        %v759 = vunpack.c.l.b16 %v695
        %v760 = vunpack.c.l.b16 %v696
        %v761 = vpack.c.b16 %v730, %v729
        %v762 = vpack.c.b16 %v732, %v731
        %v763 = vpack.c.b16 %v734, %v733
        %v764 = vpack.c.b16 %v736, %v735
        %v765 = vpack.c.b16 %v738, %v737
        %v766 = vpack.c.b16 %v740, %v739
        %v767 = vpack.c.b16 %v742, %v741
        %v768 = vpack.c.b16 %v744, %v743
        %v769 = vpack.c.b16 %v746, %v745
        %v770 = vpack.c.b16 %v748, %v747
        %v771 = vpack.c.b16 %v750, %v749
        %v772 = vpack.c.b16 %v752, %v751
        %v773 = vpack.c.b16 %v754, %v753
        %v774 = vpack.c.b16 %v756, %v755
        %v775 = vpack.c.b16 %v758, %v757
        %v776 = vpack.c.b16 %v760, %v759
        %793 = vmatprep.subr.bf16.mxu0 0
        %794 = vmatpush1.bf16.msra.mxu0 %v768
        %795 = vmatprep.subr.bf16.mxu0 0
        %796 = vmatpush1.bf16.msra.mxu0 %v767
        %797 = vmatprep.subr.bf16.mxu0 0
        %798 = vmatpush1.bf16.msra.mxu0 %v766
        %799 = vmatprep.subr.bf16.mxu0 0
        %800 = vmatpush1.bf16.msra.mxu0 %v765
        %801 = vmatprep.subr.bf16.mxu0 0
        %802 = vmatpush1.bf16.msra.mxu0 %v764
        %803 = vmatprep.subr.bf16.mxu0 0
        %804 = vmatpush1.bf16.msra.mxu0 %v763
        %805 = vmatprep.subr.bf16.mxu0 0
        %806 = vmatpush1.bf16.msra.mxu0 %v762
        %807 = vmatprep.subr.bf16.mxu0 0
        %808 = vmatpush1.bf16.msra.mxu0 %v761
        %809 = vmatprep.subr.bf16.mxu0 0
        %810 = vmatpush2.bf16.msra.mxu0 %v776
        %811 = vmatprep.subr.bf16.mxu0 0
        %812 = vmatpush2.bf16.msra.mxu0 %v775
        %813 = vmatprep.subr.bf16.mxu0 0
        %814 = vmatpush2.bf16.msra.mxu0 %v774
        %815 = vmatprep.subr.bf16.mxu0 0
        %816 = vmatpush2.bf16.msra.mxu0 %v773
        %817 = vmatprep.subr.bf16.mxu0 0
        %818 = vmatpush2.bf16.msra.mxu0 %v772
        %819 = vmatprep.subr.bf16.mxu0 0
        %820 = vmatpush2.bf16.msra.mxu0 %v771
        %821 = vmatprep.subr.bf16.mxu0 0
        %822 = vmatpush2.bf16.msra.mxu0 %v770
        %823 = vmatprep.subr.bf16.mxu0 0
        %824 = vmatpush2.bf16.msra.mxu0 %v769
        %825 = vmatprep.mubr.bf16.mxu0 %v664
        %826 = vmatmul.mubr.bf16.gmra.mxu0 %v663
        %v827 = vpop.f32.mrf.mxu0
        %v828 = vadd.f32 0.0, %v827
        %v829 = vpop.f32.mrf.mxu0
        %v830 = vpop.f32.mrf.mxu0
        %v831 = vpop.f32.mrf.mxu0
        %832 = vdwg.mxu0
        %v833 = vadd.f32 %v660, %v828
        %vm834 = vcmask 523264
        %835 = vst.msk [vmem:[#allocation2] sm:$0xff] %vm834, %v833
        %v836 = vld [vmem:[%s11] sm:$0xf]
        %v837 = vld [vmem:[%s549] sm:$0xf]
        %v838 = vld [vmem:[%s549 + $0x4] sm:$0xf]
        %v839 = vld [vmem:[%s549 + $0x8] sm:$0xf]
        %v840 = vld [vmem:[%s549 + $0xc] sm:$0xf]
        %v841 = vld [vmem:[%s549 + $0x10] sm:$0xf]
        %v842 = vld [vmem:[%s549 + $0x14] sm:$0xf]
        %v843 = vld [vmem:[%s549 + $0x18] sm:$0xf]
        %v844 = vld [vmem:[%s549 + $0x1c] sm:$0xf]
        %v845 = vld [vmem:[%s549 + $0x20] sm:$0xf]
        %v846 = vld [vmem:[%s549 + $0x24] sm:$0xf]
        %v847 = vld [vmem:[%s549 + $0x28] sm:$0xf]
        %v848 = vld [vmem:[%s549 + $0x2c] sm:$0xf]
        %v849 = vld [vmem:[%s549 + $0x30] sm:$0xf]
        %v850 = vld [vmem:[%s549 + $0x34] sm:$0xf]
        %v851 = vld [vmem:[%s549 + $0x38] sm:$0xf]
        %v852 = vld [vmem:[%s549 + $0x3c] sm:$0xf]
        %v853 = vld [vmem:[%s549 + $0x40] sm:$0xf]
        %v854 = vld [vmem:[%s549 + $0x44] sm:$0xf]
        %v855 = vld [vmem:[%s549 + $0x48] sm:$0xf]
        %v856 = vld [vmem:[%s549 + $0x4c] sm:$0xf]
        %v857 = vld [vmem:[%s549 + $0x50] sm:$0xf]
        %v858 = vld [vmem:[%s549 + $0x54] sm:$0xf]
        %v859 = vld [vmem:[%s549 + $0x58] sm:$0xf]
        %v860 = vld [vmem:[%s549 + $0x5c] sm:$0xf]
        %v861 = vld [vmem:[%s549 + $0x60] sm:$0xf]
        %v862 = vld [vmem:[%s549 + $0x64] sm:$0xf]
        %v863 = vld [vmem:[%s549 + $0x68] sm:$0xf]
        %v864 = vld [vmem:[%s549 + $0x6c] sm:$0xf]
        %v865 = vld [vmem:[%s549 + $0x70] sm:$0xf]
        %v866 = vld [vmem:[%s549 + $0x74] sm:$0xf]
        %v867 = vld [vmem:[%s549 + $0x78] sm:$0xf]
        %v868 = vld [vmem:[%s549 + $0x7c] sm:$0xf]
        %v901 = vunpack.c.l.b16 %v837
        %v902 = vunpack.c.l.b16 %v838
        %v903 = vunpack.c.l.b16 %v839
        %v904 = vunpack.c.l.b16 %v840
        %v905 = vunpack.c.l.b16 %v841
        %v906 = vunpack.c.l.b16 %v842
        %v907 = vunpack.c.l.b16 %v843
        %v908 = vunpack.c.l.b16 %v844
        %v909 = vunpack.c.l.b16 %v845
        %v910 = vunpack.c.l.b16 %v846
        %v911 = vunpack.c.l.b16 %v847
        %v912 = vunpack.c.l.b16 %v848
        %v913 = vunpack.c.l.b16 %v849
        %v914 = vunpack.c.l.b16 %v850
        %v915 = vunpack.c.l.b16 %v851
        %v916 = vunpack.c.l.b16 %v852
        %v917 = vunpack.c.l.b16 %v853
        %v918 = vunpack.c.l.b16 %v854
        %v919 = vunpack.c.l.b16 %v855
        %v920 = vunpack.c.l.b16 %v856
        %v921 = vunpack.c.l.b16 %v857
        %v922 = vunpack.c.l.b16 %v858
        %v923 = vunpack.c.l.b16 %v859
        %v924 = vunpack.c.l.b16 %v860
        %v925 = vunpack.c.l.b16 %v861
        %v926 = vunpack.c.l.b16 %v862
        %v927 = vunpack.c.l.b16 %v863
        %v928 = vunpack.c.l.b16 %v864
        %v929 = vunpack.c.l.b16 %v865
        %v930 = vunpack.c.l.b16 %v866
        %v931 = vunpack.c.l.b16 %v867
        %v932 = vunpack.c.l.b16 %v868
        %v933 = vpack.c.b16 %v902, %v901
        %v934 = vpack.c.b16 %v904, %v903
        %v935 = vpack.c.b16 %v906, %v905
        %v936 = vpack.c.b16 %v908, %v907
        %v937 = vpack.c.b16 %v910, %v909
        %v938 = vpack.c.b16 %v912, %v911
        %v939 = vpack.c.b16 %v914, %v913
        %v940 = vpack.c.b16 %v916, %v915
        %v941 = vpack.c.b16 %v918, %v917
        %v942 = vpack.c.b16 %v920, %v919
        %v943 = vpack.c.b16 %v922, %v921
        %v944 = vpack.c.b16 %v924, %v923
        %v945 = vpack.c.b16 %v926, %v925
        %v946 = vpack.c.b16 %v928, %v927
        %v947 = vpack.c.b16 %v930, %v929
        %v948 = vpack.c.b16 %v932, %v931
        %v950 = vsel %vm834, %v836, 0
        %v953 = vsel %vm834, %v933, 0
        %v956 = vsel %vm834, %v934, 0
        %v959 = vsel %vm834, %v935, 0
        %v962 = vsel %vm834, %v936, 0
        %v965 = vsel %vm834, %v937, 0
        %v968 = vsel %vm834, %v938, 0
        %v971 = vsel %vm834, %v939, 0
        %v974 = vsel %vm834, %v940, 0
        %v977 = vsel %vm834, %v941, 0
        %v980 = vsel %vm834, %v942, 0
        %v983 = vsel %vm834, %v943, 0
        %v986 = vsel %vm834, %v944, 0
        %v989 = vsel %vm834, %v945, 0
        %v992 = vsel %vm834, %v946, 0
        %v995 = vsel %vm834, %v947, 0
        %v998 = vsel %vm834, %v948, 0
        %1000 = vmatprep.subr.bf16.mxu0 0
        %1001 = vmatpush1.bf16.xpose.msra.mxu0 %v974
        %1002 = vmatprep.subr.bf16.mxu0 0
        %1003 = vmatpush1.bf16.xpose.msra.mxu0 %v971
        %1004 = vmatprep.subr.bf16.mxu0 0
        %1005 = vmatpush1.bf16.xpose.msra.mxu0 %v968
        %1006 = vmatprep.subr.bf16.mxu0 0
        %1007 = vmatpush1.bf16.xpose.msra.mxu0 %v965
        %1008 = vmatprep.subr.bf16.mxu0 0
        %1009 = vmatpush1.bf16.xpose.msra.mxu0 %v962
        %1010 = vmatprep.subr.bf16.mxu0 0
        %1011 = vmatpush1.bf16.xpose.msra.mxu0 %v959
        %1012 = vmatprep.subr.bf16.mxu0 0
        %1013 = vmatpush1.bf16.xpose.msra.mxu0 %v956
        %1014 = vmatprep.subr.bf16.mxu0 0
        %1015 = vmatpush1.bf16.xpose.msra.mxu0 %v953
        %1016 = vmatprep.subr.bf16.mxu0 0
        %1017 = vmatpush2.bf16.xpose.msra.mxu0 %v998
        %1018 = vmatprep.subr.bf16.mxu0 0
        %1019 = vmatpush2.bf16.xpose.msra.mxu0 %v995
        %1020 = vmatprep.subr.bf16.mxu0 0
        %1021 = vmatpush2.bf16.xpose.msra.mxu0 %v992
        %1022 = vmatprep.subr.bf16.mxu0 0
        %1023 = vmatpush2.bf16.xpose.msra.mxu0 %v989
        %1024 = vmatprep.subr.bf16.mxu0 0
        %1025 = vmatpush2.bf16.xpose.msra.mxu0 %v986
        %1026 = vmatprep.subr.bf16.mxu0 0
        %1027 = vmatpush2.bf16.xpose.msra.mxu0 %v983
        %1028 = vmatprep.subr.bf16.mxu0 0
        %1029 = vmatpush2.bf16.xpose.msra.mxu0 %v980
        %1030 = vmatprep.subr.bf16.mxu0 0
        %1031 = vmatpush2.bf16.xpose.msra.mxu0 %v977
        %1032 = vmatprep.mubr.bf16.mxu0 0
        %1033 = vmatmul.mubr.bf16.gmra.mxu0 %v950
        %v1034 = vpop.f32.mrf.mxu0
        %v1035 = vadd.f32 0.0, %v1034
        %v1036 = vpop.f32.mrf.mxu0
        %v1037 = vadd.f32 0.0, %v1036
        %v1038 = vpop.f32.mrf.mxu0
        %v1039 = vpop.f32.mrf.mxu0
        %1040 = vdwg.mxu0
        %v1041 = vsel %vm561, 1, 0
        %v1042 = vsel %vm562, 1, 0
        %vm1043 = vcmp.eq.s32.totalorder %v1041, 1
        %vm1044 = vcmp.eq.s32.totalorder %v1042, 1
        %v1045 = vsel %vm1043, %v1035, -inf
        %v1046 = vsel %vm1044, %v1037, -inf
        %s1047 = smul.u32 %s30, 2
        %s1048 = smul.addr %s1047, 8
        %s1049 = scalar_lea.vmem [#allocation7], %s1048
        %1050 = vst [vmem:[%s1049] sm:$0xff] %v1045
        %1051 = vst [vmem:[%s1049 + $0x8] sm:$0xff] %v1046
        %v1052 = vmax.f32 %v1045, %v1046
        %1053 = vmax.xlane.f32.xlu0 %v1052
        %v1054 = vpop.xlane.xlu0 %1053
        %v1055 = vld [vmem:[#allocation3] sm:$0xff]
        %v1056 = vmax.f32 %v1055, %v1054
        %v1057 = vld [vmem:[#allocation4] sm:$0xff]
        %v1058 = vsub.f32 %v1055, %v1056
        %v1059 = vmul.f32 %v1058, 1.442695
        %v1060 = vpow.pop %v1059
        %v1061 = vmul.f32 %v1057, %v1060
        %1063 = vset.pattern.permute.xlu0 0
        %1064 = vperm.xlu0 %1063, %v1056
        %v1065 = vpop.permute.xlu0 %1064
        %v1067 = vsub.f32 %v1045, %v1065
        %v1068 = vsub.f32 %v1046, %v1065
        %v1069 = vmul.f32 %v1067, 1.442695
        %v1070 = vpow.pop %v1069
        %v1071 = vmul.f32 %v1068, 1.442695
        %v1072 = vpow.pop %v1071
        %v1073 = vadd.f32 %v1070, %v1072
        %1074 = vadd.xlane.f32.xlu0 %v1073
        %v1075 = vpop.xlane.xlu0 %1074
        %v1076 = vadd.f32 %v1061, %v1075
        %vm1077 = vcmask 7168
        %1078 = vst.msk [vmem:[#allocation4] sm:$0xff] %vm1077, %v1076
        %1079 = vst.msk [vmem:[#allocation3] sm:$0xff] %vm1077, %v1056
      $region76: #{mixmedia_forward.3} parent=67 // pred_fallthru
        _
      // Predicated region
      $region77: #{mixmedia_forward.3} parent=67 // pred_check
        _
      $region78: #{mixmedia_forward.3} parent=67 // pred_check_branch
        %1081 = sbr.rel (%p565) target = $region80
      $region79: #{mixmedia_forward.3} parent=67 // pred_region
        %v1082 = vld [vmem:[#allocation2] sm:$0xff]
        %v1083 = vtanh.pop %v1082
        %v1084 = vld [vmem:[%s7] sm:$0xff]
        %v1085 = vld [vmem:[%s7 + $0x8] sm:$0xff]
        %v1086 = vld [vmem:[%s7 + $0x10] sm:$0xff]
        %v1087 = vld [vmem:[%s7 + $0x18] sm:$0xff]
        %v1088 = vld [vmem:[%s7 + $0x20] sm:$0xff]
        %v1089 = vld [vmem:[%s7 + $0x28] sm:$0xff]
        %v1090 = vld [vmem:[%s7 + $0x30] sm:$0xff]
        %v1091 = vld [vmem:[%s7 + $0x38] sm:$0xff]
        %v1092 = vld [vmem:[%s8] sm:$0x1]
        %v1094 = vlaneseq
        %v1095 = vshrl.u32 %v1094, 7
        %v1096 = vsub.s32 0, %v1095
        %v1097 = vrot.slane %v1092, %v1096
        %vm1099 = vcmask 523264
        %v1101 = vsel %vm1099, %v1083, 0
        %1103 = vmatprep.subr.mxu0 0.0
        %1104 = vmatpush1.msra.mxu0 0.0
        %1105 = vmatprep.subr.mxu0 0.0
        %1106 = vmatpush1.msra.mxu0 0.0
        %1107 = vmatprep.subr.mxu0 0.0
        %1108 = vmatpush1.msra.mxu0 0.0
        %1109 = vmatprep.subr.mxu0 0.0
        %1110 = vmatpush1.msra.mxu0 0.0
        %1111 = vmatprep.subr.mxu0 0.0
        %1112 = vmatpush1.msra.mxu0 0.0
        %1113 = vmatprep.subr.mxu0 0.0
        %1114 = vmatpush1.msra.mxu0 0.0
        %1115 = vmatprep.subr.mxu0 0.0
        %1116 = vmatpush1.msra.mxu0 0.0
        %1117 = vmatprep.subr.mxu0 0.0
        %1118 = vmatpush1.msra.mxu0 0.0
        %1119 = vmatprep.subr.mxu0 0.0
        %1120 = vmatpush1.msra.mxu0 %v1091
        %1121 = vmatprep.subr.mxu0 0.0
        %1122 = vmatpush1.msra.mxu0 %v1090
        %1123 = vmatprep.subr.mxu0 0.0
        %1124 = vmatpush1.msra.mxu0 %v1089
        %1125 = vmatprep.subr.mxu0 0.0
        %1126 = vmatpush1.msra.mxu0 %v1088
        %1127 = vmatprep.subr.mxu0 0.0
        %1128 = vmatpush1.msra.mxu0 %v1087
        %1129 = vmatprep.subr.mxu0 0.0
        %1130 = vmatpush1.msra.mxu0 %v1086
        %1131 = vmatprep.subr.mxu0 0.0
        %1132 = vmatpush1.msra.mxu0 %v1085
        %1133 = vmatprep.subr.mxu0 0.0
        %1134 = vmatpush1.msra.mxu0 %v1084
        %1135 = vmatprep.subr.mxu0 0.0
        %1136 = vmatpush2.msra.mxu0 0.0
        %1137 = vmatprep.subr.mxu0 0.0
        %1138 = vmatpush2.msra.mxu0 0.0
        %1139 = vmatprep.subr.mxu0 0.0
        %1140 = vmatpush2.msra.mxu0 0.0
        %1141 = vmatprep.subr.mxu0 0.0
        %1142 = vmatpush2.msra.mxu0 0.0
        %1143 = vmatprep.subr.mxu0 0.0
        %1144 = vmatpush2.msra.mxu0 0.0
        %1145 = vmatprep.subr.mxu0 0.0
        %1146 = vmatpush2.msra.mxu0 0.0
        %1147 = vmatprep.subr.mxu0 0.0
        %1148 = vmatpush2.msra.mxu0 0.0
        %1149 = vmatprep.subr.mxu0 0.0
        %1150 = vmatpush2.msra.mxu0 0.0
        %1151 = vmatprep.subr.mxu0 0.0
        %1152 = vmatpush2.msra.mxu0 0.0
        %1153 = vmatprep.subr.mxu0 0.0
        %1154 = vmatpush2.msra.mxu0 0.0
        %1155 = vmatprep.subr.mxu0 0.0
        %1156 = vmatpush2.msra.mxu0 0.0
        %1157 = vmatprep.subr.mxu0 0.0
        %1158 = vmatpush2.msra.mxu0 0.0
        %1159 = vmatprep.subr.mxu0 0.0
        %1160 = vmatpush2.msra.mxu0 0.0
        %1161 = vmatprep.subr.mxu0 0.0
        %1162 = vmatpush2.msra.mxu0 0.0
        %1163 = vmatprep.subr.mxu0 0.0
        %1164 = vmatpush2.msra.mxu0 0.0
        %1165 = vmatprep.subr.mxu0 0.0
        %1166 = vmatpush2.msra.mxu0 0.0
        %1167 = vmatprep.mubr.f32.mxu0 0.0
        %1168 = vmatmul.mubr.f32.gmra.mxu0 %v1101
        %v1169 = vpop.f32.mrf.mxu0
        %v1170 = vadd.f32 %v1097, %v1169
        %v1171 = vpop.f32.mrf.mxu0
        %1172 = vdwg.mxu0
        %v1173 = vtanh.pop %v1170
        %v1174 = vld [vmem:[%s9] sm:$0xff]
        %v1175 = vld [vmem:[%s9 + $0x8] sm:$0xff]
        %v1176 = vld [vmem:[%s9 + $0x10] sm:$0xff]
        %v1177 = vld [vmem:[%s9 + $0x18] sm:$0xff]
        %v1178 = vld [vmem:[%s9 + $0x20] sm:$0xff]
        %v1179 = vld [vmem:[%s9 + $0x28] sm:$0xff]
        %v1180 = vld [vmem:[%s9 + $0x30] sm:$0xff]
        %v1181 = vld [vmem:[%s9 + $0x38] sm:$0xff]
        %v1182 = vld [vmem:[%s10] sm:$0x1]
        %v1184 = vlaneseq
        %v1185 = vshrl.u32 %v1184, 7
        %v1186 = vsub.s32 0, %v1185
        %v1187 = vrot.slane %v1182, %v1186
        %v1190 = vsel %vm1099, %v1173, 0
        %1192 = vmatprep.subr.mxu0 0.0
        %1193 = vmatpush1.msra.mxu0 0.0
        %1194 = vmatprep.subr.mxu0 0.0
        %1195 = vmatpush1.msra.mxu0 0.0
        %1196 = vmatprep.subr.mxu0 0.0
        %1197 = vmatpush1.msra.mxu0 0.0
        %1198 = vmatprep.subr.mxu0 0.0
        %1199 = vmatpush1.msra.mxu0 0.0
        %1200 = vmatprep.subr.mxu0 0.0
        %1201 = vmatpush1.msra.mxu0 0.0
        %1202 = vmatprep.subr.mxu0 0.0
        %1203 = vmatpush1.msra.mxu0 0.0
        %1204 = vmatprep.subr.mxu0 0.0
        %1205 = vmatpush1.msra.mxu0 0.0
        %1206 = vmatprep.subr.mxu0 0.0
        %1207 = vmatpush1.msra.mxu0 0.0
        %1208 = vmatprep.subr.mxu0 0.0
        %1209 = vmatpush1.msra.mxu0 %v1181
        %1210 = vmatprep.subr.mxu0 0.0
        %1211 = vmatpush1.msra.mxu0 %v1180
        %1212 = vmatprep.subr.mxu0 0.0
        %1213 = vmatpush1.msra.mxu0 %v1179
        %1214 = vmatprep.subr.mxu0 0.0
        %1215 = vmatpush1.msra.mxu0 %v1178
        %1216 = vmatprep.subr.mxu0 0.0
        %1217 = vmatpush1.msra.mxu0 %v1177
        %1218 = vmatprep.subr.mxu0 0.0
        %1219 = vmatpush1.msra.mxu0 %v1176
        %1220 = vmatprep.subr.mxu0 0.0
        %1221 = vmatpush1.msra.mxu0 %v1175
        %1222 = vmatprep.subr.mxu0 0.0
        %1223 = vmatpush1.msra.mxu0 %v1174
        %1224 = vmatprep.subr.mxu0 0.0
        %1225 = vmatpush2.msra.mxu0 0.0
        %1226 = vmatprep.subr.mxu0 0.0
        %1227 = vmatpush2.msra.mxu0 0.0
        %1228 = vmatprep.subr.mxu0 0.0
        %1229 = vmatpush2.msra.mxu0 0.0
        %1230 = vmatprep.subr.mxu0 0.0
        %1231 = vmatpush2.msra.mxu0 0.0
        %1232 = vmatprep.subr.mxu0 0.0
        %1233 = vmatpush2.msra.mxu0 0.0
        %1234 = vmatprep.subr.mxu0 0.0
        %1235 = vmatpush2.msra.mxu0 0.0
        %1236 = vmatprep.subr.mxu0 0.0
        %1237 = vmatpush2.msra.mxu0 0.0
        %1238 = vmatprep.subr.mxu0 0.0
        %1239 = vmatpush2.msra.mxu0 0.0
        %1240 = vmatprep.subr.mxu0 0.0
        %1241 = vmatpush2.msra.mxu0 0.0
        %1242 = vmatprep.subr.mxu0 0.0
        %1243 = vmatpush2.msra.mxu0 0.0
        %1244 = vmatprep.subr.mxu0 0.0
        %1245 = vmatpush2.msra.mxu0 0.0
        %1246 = vmatprep.subr.mxu0 0.0
        %1247 = vmatpush2.msra.mxu0 0.0
        %1248 = vmatprep.subr.mxu0 0.0
        %1249 = vmatpush2.msra.mxu0 0.0
        %1250 = vmatprep.subr.mxu0 0.0
        %1251 = vmatpush2.msra.mxu0 0.0
        %1252 = vmatprep.subr.mxu0 0.0
        %1253 = vmatpush2.msra.mxu0 0.0
        %1254 = vmatprep.subr.mxu0 0.0
        %1255 = vmatpush2.msra.mxu0 0.0
        %1256 = vmatprep.mubr.f32.mxu0 0.0
        %1257 = vmatmul.mubr.f32.gmra.mxu0 %v1190
        %v1258 = vpop.f32.mrf.mxu0
        %v1259 = vadd.f32 %v1187, %v1258
        %v1260 = vpop.f32.mrf.mxu0
        %1261 = vdwg.mxu0
        %vm1262 = vcmask 130112
        %v1263 = vsel %vm1262, %v1259, -inf
        %1264 = vmax.xlane.f32.xlu0 %v1263
        %v1265 = vpop.xlane.xlu0 %1264
        %v1266 = vrot.slane %v1265, 4
        %v1267 = vmax.f32 %v1265, %v1266
        %v1268 = vrot.slane %v1267, 2
        %v1269 = vmax.f32 %v1267, %v1268
        %v1270 = vrot.slane %v1269, 1
        %v1271 = vmax.f32 %v1269, %v1270
        %s1272 = vtos %v1271
        %v1273 = vstv %s1272
        %vm1274 = vcmp.gt.f32.partialorder %v1273, 10.0
        %v1275 = vsel %vm1262, %v1259, inf
        %1276 = vmin.xlane.f32.xlu0 %v1275
        %v1277 = vpop.xlane.xlu0 %1276
        %v1278 = vrot.slane %v1277, 4
        %v1279 = vmin.f32 %v1277, %v1278
        %v1280 = vrot.slane %v1279, 2
        %v1281 = vmin.f32 %v1279, %v1280
        %v1282 = vrot.slane %v1281, 1
        %v1283 = vmin.f32 %v1281, %v1282
        %s1284 = vtos %v1283
        %v1285 = vstv %s1284
        %vm1286 = vcmp.lt.f32.partialorder %v1285, -10.0
        %v1287 = vmin.f32 %v1259, 10.0
        %v1288 = vmax.f32 %v1259, -10.0
        %v1289 = vsel %vm1286, %v1288, %v1259
        %v1290 = vsel %vm1274, %v1287, %v1289
        %vm1291 = vcmask 64512
        %v1292 = vsel %vm1291, %v1259, -inf
        %1293 = vmax.xlane.f32.xlu0 %v1292
        %v1294 = vpop.xlane.xlu0 %1293
        %v1295 = vsub.f32 %v1259, %v1294
        %v1296 = vmul.f32 %v1295, 1.442695
        %v1297 = vpow.pop %v1296
        %v1298 = vsel %vm1291, %v1297, 0.0
        %1299 = vadd.xlane.f32.xlu0 %v1298
        %v1300 = vpop.xlane.xlu0 %1299
        %v1301 = vrcp.pop %v1300
        %v1302 = vmul.f32 %v1297, %v1301
        %1303 = vst.msk [vmem:[#allocation5] sm:$0xff] %vm1291, %v1302
        %v1304 = vld [vmem:[%s4] sm:$0xff]
        %v1305 = vsub.f32 %v1259, %v1304
        %v1306 = vmul.f32 %v1290, 1.442695
        %v1307 = vpow.pop %v1306
        %v1308 = vmul.f32 %v1305, %v1305
        %1310 = vrot.lane.b32.xlu0 %v1308, 8
        %v1311 = vpop.permute.xlu0 %1310
        %v1313 = vadd.f32 %v1307, %v1311
        %v1314 = vrcp.pop 1.000001
        %v1315 = vmul.f32 %v1313, %v1314
        %v1316 = vsub.f32 %v1315, 1.0
        %v1317 = vsub.f32 %v1316, %v1290
        %1319 = vrot.lane.b32.xlu0 %v1317, 120
        %v1320 = vpop.permute.xlu0 %1319
        %v1322 = vsel %vm1291, %v1320, 0.0
        %1323 = vadd.xlane.f32.xlu0 %v1322
        %v1324 = vpop.xlane.xlu0 %1323
        %v1325 = vmul.f32 %v1324, 0.5
        %1326 = vst [vmem:[%s12] sm:$0xff] %v1325
        %v1327 = vld [vmem:[#allocation3] sm:$0xff]
        %v1328 = vld [vmem:[#allocation4] sm:$0xff]
        %v1329 = vlog2.pop %v1328
        %v1330 = vmul.f32 %v1329, 0.6931472
        %v1331 = vadd.f32 %v1327, %v1330
        %vm1332 = vcmask 7168
        %1333 = vst.msk [vmem:[#allocation3] sm:$0xff] %vm1332, %v1331
      $region80: #{mixmedia_forward.3} parent=67 // pred_fallthru
        _
      %p1334 = scmp.eq.s32.totalorder %s29, 1
      %p1335 = pnand %p1334, %p564
      %p1336 = pneg %p1335
      // Predicated region
      $region81: #{mixmedia_forward.3} parent=67 // pred_check
        _
      $region82: #{mixmedia_forward.3} parent=67 // pred_check_branch
        %1338 = sbr.rel (%p1335) target = $region84
      $region83: #{mixmedia_forward.3} parent=67 // pred_region
        %vm1339 = vcmask 7168
        %1340 = vst.msk [vmem:[#allocation6] sm:$0xff] %vm1339, 0.0
      $region84: #{mixmedia_forward.3} parent=67 // pred_fallthru
        _
      // Predicated region
      $region85: #{mixmedia_forward.3} parent=67 // pred_check
        %p1341 = pneg %p1334
      $region86: #{mixmedia_forward.3} parent=67 // pred_check_branch
        %1343 = sbr.rel (%p1341) target = $region88
      $region87: #{mixmedia_forward.3} parent=67 // pred_region
        %s1344 = smul.u32 %s30, 2
        %s1345 = smul.addr %s1344, 8
        %s1346 = scalar_lea.vmem [#allocation7], %s1345
        %v1347 = vld [vmem:[%s1346] sm:$0xff]
        %v1348 = vld [vmem:[%s1346 + $0x8] sm:$0xff]
        %v1349 = vld [vmem:[#allocation3] sm:$0xff]
        %1351 = vset.pattern.permute.xlu0 0
        %1352 = vperm.xlu0 %1351, %v1349
        %v1353 = vpop.permute.xlu0 %1352
        %v1355 = vsub.f32 %v1347, %v1353
        %v1356 = vsub.f32 %v1348, %v1353
        %v1357 = vmul.f32 %v1355, 1.442695
        %v1358 = vpow.pop %v1357
        %v1359 = vmul.f32 %v1356, 1.442695
        %v1360 = vpow.pop %v1359
        %v1361 = vld [vmem:[#allocation5] sm:$0xff]
        %vm1362 = vcmask 64512
        %v1364 = vsel %vm1362, %v1361, 0
        %1366 = vmatprep.subr.mxu0 0.0
        %1367 = vmatpush1.msra.mxu0 0.0
        %1368 = vmatprep.subr.mxu0 0.0
        %1369 = vmatpush1.msra.mxu0 0.0
        %1370 = vmatprep.subr.mxu0 0.0
        %1371 = vmatpush1.msra.mxu0 0.0
        %1372 = vmatprep.subr.mxu0 0.0
        %1373 = vmatpush1.msra.mxu0 0.0
        %1374 = vmatprep.subr.mxu0 0.0
        %1375 = vmatpush1.msra.mxu0 0.0
        %1376 = vmatprep.subr.mxu0 0.0
        %1377 = vmatpush1.msra.mxu0 0.0
        %1378 = vmatprep.subr.mxu0 0.0
        %1379 = vmatpush1.msra.mxu0 0.0
        %1380 = vmatprep.subr.mxu0 0.0
        %1381 = vmatpush1.msra.mxu0 0.0
        %1382 = vmatprep.subr.mxu0 0.0
        %1383 = vmatpush1.msra.mxu0 0.0
        %1384 = vmatprep.subr.mxu0 0.0
        %1385 = vmatpush1.msra.mxu0 0.0
        %1386 = vmatprep.subr.mxu0 0.0
        %1387 = vmatpush1.msra.mxu0 0.0
        %1388 = vmatprep.subr.mxu0 0.0
        %1389 = vmatpush1.msra.mxu0 0.0
        %1390 = vmatprep.subr.mxu0 0.0
        %1391 = vmatpush1.msra.mxu0 0.0
        %1392 = vmatprep.subr.mxu0 0.0
        %1393 = vmatpush1.msra.mxu0 0.0
        %1394 = vmatprep.subr.mxu0 0.0
        %1395 = vmatpush1.msra.mxu0 0.0
        %1396 = vmatprep.subr.mxu0 %v1360
        %1397 = vmatpush1.msra.mxu0 %v1358
        %1398 = vmatprep.subr.mxu0 0.0
        %1399 = vmatpush2.msra.mxu0 0.0
        %1400 = vmatprep.subr.mxu0 0.0
        %1401 = vmatpush2.msra.mxu0 0.0
        %1402 = vmatprep.subr.mxu0 0.0
        %1403 = vmatpush2.msra.mxu0 0.0
        %1404 = vmatprep.subr.mxu0 0.0
        %1405 = vmatpush2.msra.mxu0 0.0
        %1406 = vmatprep.subr.mxu0 0.0
        %1407 = vmatpush2.msra.mxu0 0.0
        %1408 = vmatprep.subr.mxu0 0.0
        %1409 = vmatpush2.msra.mxu0 0.0
        %1410 = vmatprep.subr.mxu0 0.0
        %1411 = vmatpush2.msra.mxu0 0.0
        %1412 = vmatprep.subr.mxu0 0.0
        %1413 = vmatpush2.msra.mxu0 0.0
        %1414 = vmatprep.subr.mxu0 0.0
        %1415 = vmatpush2.msra.mxu0 0.0
        %1416 = vmatprep.subr.mxu0 0.0
        %1417 = vmatpush2.msra.mxu0 0.0
        %1418 = vmatprep.subr.mxu0 0.0
        %1419 = vmatpush2.msra.mxu0 0.0
        %1420 = vmatprep.subr.mxu0 0.0
        %1421 = vmatpush2.msra.mxu0 0.0
        %1422 = vmatprep.subr.mxu0 0.0
        %1423 = vmatpush2.msra.mxu0 0.0
        %1424 = vmatprep.subr.mxu0 0.0
        %1425 = vmatpush2.msra.mxu0 0.0
        %1426 = vmatprep.subr.mxu0 0.0
        %1427 = vmatpush2.msra.mxu0 0.0
        %1428 = vmatprep.subr.mxu0 0.0
        %1429 = vmatpush2.msra.mxu0 0.0
        %1430 = vmatprep.mubr.f32.mxu0 0.0
        %1431 = vmatmul.mubr.f32.gmra.mxu0 %v1364
        %v1432 = vpop.f32.mrf.mxu0
        %v1433 = vadd.f32 0.0, %v1432
        %v1434 = vpop.f32.mrf.mxu0
        %v1435 = vadd.f32 0.0, %v1434
        %1436 = vdwg.mxu0
        %v1437 = vlog2.pop %v1433
        %v1438 = vmul.f32 %v1437, 0.6931472
        %v1439 = vlog2.pop %v1435
        %v1440 = vmul.f32 %v1439, 0.6931472
        %v1441 = vsub.f32 0.0, %v1438
        %v1442 = vsub.f32 0.0, %v1440
        %v1443 = vld [vmem:[%s530] sm:$0xff]
        %v1444 = vld [vmem:[%s530 + $0x8] sm:$0xff]
        %v1445 = vmul.f32 %v1441, %v1443
        %v1446 = vmul.f32 %v1442, %v1444
        %v1447 = vsel %vm561, 1, 0
        %v1448 = vsel %vm562, 1, 0
        %vm1449 = vcmp.eq.s32.totalorder %v1447, 1
        %vm1450 = vcmp.eq.s32.totalorder %v1448, 1
        %v1451 = vsel %vm1449, %v1445, 0.0
        %v1452 = vsel %vm1450, %v1446, 0.0
        %v1453 = vld [vmem:[#allocation6] sm:$0xff]
        %v1454 = vadd.f32 %v1451, %v1452
        %1455 = vadd.xlane.f32.xlu0 %v1454
        %v1456 = vpop.xlane.xlu0 %1455
        %v1457 = vadd.f32 %v1453, %v1456
        %vm1458 = vcmask 7168
        %1459 = vst.msk [vmem:[#allocation6] sm:$0xff] %vm1458, %v1457
      $region88: #{mixmedia_forward.3} parent=67 // pred_fallthru
        _
      // Predicated region
      $region89: #{mixmedia_forward.3} parent=67 // pred_check
        _
      $region90: #{mixmedia_forward.3} parent=67 // pred_check_branch
        %1461 = sbr.rel (%p1335) target = $region92
      $region91: #{mixmedia_forward.3} parent=67 // pred_region
        %v1462 = vld [vmem:[#allocation6] sm:$0xff]
        %1464 = vset.pattern.permute.xlu0 0
        %1465 = vperm.xlu0 %1464, %v1462
        %v1466 = vpop.permute.xlu0 %1465
        %1468 = vst [vmem:[%s13] sm:$0xff] %v1466
      $region92: #{mixmedia_forward.3} parent=67 // pred_fallthru
        _
      // Predicated region
      $region93: #{mixmedia_forward.3} parent=67 // pred_check
        %p1469 = pneg %p336
      $region94: #{mixmedia_forward.3} parent=67 // pred_check_branch
        %1471 = sbr.rel (%p1469) target = $region96
      $region95: #{mixmedia_forward.3} parent=67 // pred_region
        _
      $region96: #{mixmedia_forward.3} parent=67 // pred_fallthru
        _
      // Predicated region
      $region97: #{mixmedia_forward.3} parent=67 // pred_check
        %p1472 = pneg %p357
      $region98: #{mixmedia_forward.3} parent=67 // pred_check_branch
        %1474 = sbr.rel (%p1472) target = $region100
      $region99: #{mixmedia_forward.3} parent=67 // pred_region
        _
      $region100: #{mixmedia_forward.3} parent=67 // pred_fallthru
        _
      // Predicated region
      $region101: #{mixmedia_forward.3} parent=67 // pred_check
        %p1475 = pneg %p336
      $region102: #{mixmedia_forward.3} parent=67 // pred_check_branch
        %1477 = sbr.rel (%p1475) target = $region104
      $region103: #{mixmedia_forward.3} parent=67 // pred_region
        _
      $region104: #{mixmedia_forward.3} parent=67 // pred_fallthru
        _
      // Predicated region
      $region105: #{mixmedia_forward.3} parent=67 // pred_check
        %p1478 = pneg %p357
      $region106: #{mixmedia_forward.3} parent=67 // pred_check_branch
        %1480 = sbr.rel (%p1478) target = $region108
      $region107: #{mixmedia_forward.3} parent=67 // pred_region
        _
      $region108: #{mixmedia_forward.3} parent=67 // pred_fallthru
        _
    $region68: #{mixmedia_forward.3} parent=5 // pred_fallthru
      _
    %p1481 = scmp.le.s32.totalorder 2, %s20
    // Predicated region
    $region109: #{mixmedia_forward.3} parent=5 // pred_check
      %p1482 = pneg %p1481
    $region110: #{mixmedia_forward.3} parent=5 // pred_check_branch
      %1484 = sbr.rel (%p1482) target = $region112
    $region111: #{mixmedia_forward.3} parent=5 // pred_region
      %s1485 = ssub.s32 %s20, 2
    $region112: #{mixmedia_forward.3} parent=5 // pred_fallthru
      _
  $region6: #{mixmedia_forward.3} parent=0 // loop_footer
    %s24 = sadd.s32 1, %s20
  $region7: #{mixmedia_forward.3} parent=0 // loop_footer_branch
    %19 = sbr.rel target = $region3
  $region8: #{mixmedia_forward.3} parent=0 // loop_exit
    _

</llo_original>
